<compile_context>
chip_gen: v7x
topology: tpu7x:2x2x1
jax: 0.10.0
libtpu: 0.0.40
codegen_flags: <defaults>
</compile_context>

<pallas_src>
import functools

import jax
import jax.numpy as jnp
from jax.experimental import pallas as pl
from jax.experimental.pallas import tpu as pltpu

LANE = 128
MiB = 1 << 20


def _round_up(x, m):
    return (x + m - 1) // m * m


def _pick_tile(n, target):
    """Largest multiple of 128 that divides n and is <= target (n must be a multiple of 128)."""
    t = min(target, n)
    t = max(LANE, t - (t % LANE))
    while n % t != 0:
        t -= LANE
    return t


def _clamp_vmem_limit(est_bytes):
    # >= default scoped limit everywhere, but safely under v7x's 64 MiB physical VMEM.
    return int(min(48 * MiB, max(32 * MiB, 1.5 * est_bytes)))


# ----------------------------------------------------------------------------------
# Fused path (small graphs): all layers in one pallas_call, everything VMEM resident.
# ----------------------------------------------------------------------------------
def _fused_kernel(*refs, num_layers):
    a_ref, invdeg_ref, h_ref = refs[0], refs[1], refs[2]
    o_ref = refs[-1]

    a = a_ref[...].astype(jnp.bfloat16)        # exact 0/1 int8 -> bf16 for the MXU
    inv_deg = invdeg_ref[...]                  # (N, 1) f32
    h = h_ref[...]                             # (N, Finp) f32

    for li in range(num_layers):
        ws = refs[3 + 3 * li][...]
        wn = refs[4 + 3 * li][...]
        b = refs[5 + 3 * li][...]
        p = jnp.dot(h, wn, preferred_element_type=jnp.float32)
        neigh = jnp.dot(a, p.astype(jnp.bfloat16),
                        preferred_element_type=jnp.float32) * inv_deg
        h = jnp.dot(h, ws, preferred_element_type=jnp.float32) + neigh + b
        if li != num_layers - 1:
            h = jnp.maximum(h, 0.0)

    o_ref[...] = h.astype(o_ref.dtype)


def _fused_vmem_bytes(n, finp0, padded_params):
    max_f = finp0
    total = 3 * n * n                      # int8 adjacency + in-kernel bf16 copy
    total += n * 4                         # inv_deg
    total += n * finp0 * 4                 # input features
    for ws, wn, _ in padded_params:
        finp, foutp = ws.shape
        max_f = max(max_f, finp, foutp)
        total += (2 * finp * foutp + foutp) * 4
    total += n * padded_params[-1][0].shape[1] * 4   # output
    total += 6 * n * max_f * 4                       # in-kernel temporaries
    return total


def graphsage_fused(a_i8, inv_deg, h, padded_params):
    n = a_i8.shape[0]
    num_layers = len(padded_params)
    foutp_last = padded_params[-1][0].shape[1]

    flat = []
    for ws, wn, b in padded_params:
        flat.extend((ws, wn, b))
    operands = [a_i8, inv_deg, h] + flat
    in_specs = [pl.BlockSpec(x.shape, lambda i: (0, 0)) for x in operands]

    vmem_limit = _clamp_vmem_limit(_fused_vmem_bytes(n, h.shape[1], padded_params))
    return pl.pallas_call(
        functools.partial(_fused_kernel, num_layers=num_layers),
        out_shape=jax.ShapeDtypeStruct((n, foutp_last), jnp.float32),
        grid=(1,),
        in_specs=in_specs,
        out_specs=pl.BlockSpec((n, foutp_last), lambda i: (0, 0)),
        compiler_params=pltpu.CompilerParams(
            dimension_semantics=("arbitrary",),
            vmem_limit_bytes=vmem_limit,
        ),
    )(*operands)


# ----------------------------------------------------------------------------------
# Projection kernel:  P = h @ W_neigh   (f32 in, f32 accumulate, bf16 out for the A @ P matmul).
# ----------------------------------------------------------------------------------
def _proj_kernel(h_ref, w_ref, o_ref):
    o_ref[...] = jnp.dot(
        h_ref[...], w_ref[...], preferred_element_type=jnp.float32
    ).astype(o_ref.dtype)


def neighbor_projection(h, w_neigh, *, tp):
    n, finp = h.shape
    foutp = w_neigh.shape[1]
    return pl.pallas_call(
        _proj_kernel,
        out_shape=jax.ShapeDtypeStruct((n, foutp), jnp.bfloat16),
        grid=(n // tp,),
        in_specs=[
            pl.BlockSpec((tp, finp), lambda i: (i, 0)),
            pl.BlockSpec((finp, foutp), lambda i: (0, 0)),
        ],
        out_specs=pl.BlockSpec((tp, foutp), lambda i: (i, 0)),
        compiler_params=pltpu.CompilerParams(dimension_semantics=("parallel",)),
    )(h, w_neigh)


# ----------------------------------------------------------------------------------
# Aggregation kernel:  out = (A_{0/1} @ P) * inv_deg + h_self @ W_self + b  (K-tiled over sources)
#   a_ref     : (tn, tk)          int8  exact 0/1 adjacency tile (cast to bf16 in-kernel)
#   pn_ref    : (N, Foutp)|(tk,.) bf16  projected neighbor features (VMEM resident or streamed)
#   hs_ref    : (tn, Finp)        f32   self features for this dest tile
#   ws_ref    : (Finp, Foutp)     f32
#   b_ref     : (1, Foutp)        f32
#   invdeg_ref: (tn, 1)           f32   per-dest-row 1/deg
#   o_ref     : (tn, Foutp)       f32   VMEM-resident accumulator across the reduction axis
# ----------------------------------------------------------------------------------
def _agg_kernel(a_ref, pn_ref, hs_ref, ws_ref, b_ref, invdeg_ref, o_ref, *,
                apply_relu, tk, resident_p):
    k = pl.program_id(1)

    @pl.when(k == 0)
    def _():
        o_ref[...] = jnp.zeros_like(o_ref)

    a_tile = a_ref[...].astype(jnp.bfloat16)
    if resident_p:
        start = pl.multiple_of(k * tk, tk)
        p_tile = pn_ref[pl.ds(start, tk), :]
    else:
        p_tile = pn_ref[...]
    o_ref[...] += jnp.dot(a_tile, p_tile, preferred_element_type=jnp.float32)

    @pl.when(k == pl.num_programs(1) - 1)
    def _():
        out = (
            o_ref[...] * invdeg_ref[...]
            + jnp.dot(hs_ref[...], ws_ref[...], preferred_element_type=jnp.float32)
            + b_ref[...]
        )
        if apply_relu:
            out = jnp.maximum(out, 0.0)
        o_ref[...] = out


def _agg_vmem_bytes(tn, tk, n, finp, foutp, resident_p):
    b = 2 * tn * tk                                    # int8 A, double buffered
    b += (2 * n * foutp * 2) if resident_p else (2 * tk * foutp * 2)
    b += 2 * tn * finp * 4                             # self features
    b += 2 * finp * foutp * 4                          # W_self
    b += 2 * foutp * 4 + 2 * tn * 4                    # bias + inv_deg
    b += 2 * tn * foutp * 4                            # output block
    b += tn * tk * 2                                   # in-kernel bf16 copy of A tile
    return b


def sage_aggregate(a_i8, p_neigh, h, w_self, bias, inv_deg, *,
                   apply_relu, tn, tk, resident_p):
    n = a_i8.shape[0]
    finp = h.shape[1]
    foutp = w_self.shape[1]

    if resident_p:
        pn_spec = pl.BlockSpec((n, foutp), lambda i, k: (0, 0))     # VMEM resident, sliced in-kernel
    else:
        pn_spec = pl.BlockSpec((tk, foutp), lambda i, k: (k, 0))    # streamed per reduction step

    vmem_limit = _clamp_vmem_limit(_agg_vmem_bytes(tn, tk, n, finp, foutp, resident_p))
    kernel = functools.partial(_agg_kernel, apply_relu=apply_relu, tk=tk,
                               resident_p=resident_p)
    return pl.pallas_call(
        kernel,
        out_shape=jax.ShapeDtypeStruct((n, foutp), jnp.float32),
        grid=(n // tn, n // tk),                     # reduction (source-node) axis last
        in_specs=[
            pl.BlockSpec((tn, tk), lambda i, k: (i, k)),        # int8 0/1 adjacency tile
            pn_spec,                                            # projected neighbor features
            pl.BlockSpec((tn, finp), lambda i, k: (i, 0)),      # self features
            pl.BlockSpec((finp, foutp), lambda i, k: (0, 0)),   # W_self
            pl.BlockSpec((1, foutp), lambda i, k: (0, 0)),      # bias
            pl.BlockSpec((tn, 1), lambda i, k: (i, 0)),         # per-dest-row 1/deg
        ],
        out_specs=pl.BlockSpec((tn, foutp), lambda i, k: (i, 0)),
        compiler_params=pltpu.CompilerParams(
            dimension_semantics=("parallel", "arbitrary"),
            vmem_limit_bytes=vmem_limit,
        ),
    )(a_i8, p_neigh, h, w_self, bias, inv_deg)


# ----------------------------------------------------------------------------------
# Forward pass
# ----------------------------------------------------------------------------------
def graphsage_forward(adj, features, params, *,
                      max_fused_bytes=16 * MiB,
                      max_resident_p_bytes=8 * MiB):
    """adj: (N, N) exact 0/1 adjacency (no self loops).  params: [(w_self, w_neigh, bias), ...]."""
    n = adj.shape[0]
    num_layers = len(params)
    out_feats = params[-1][0].shape[1]

    adj_f32 = adj.astype(jnp.float32)
    deg = adj_f32.sum(axis=1, keepdims=True)
    inv_deg = jnp.where(deg > 0, 1.0 / jnp.maximum(deg, 1.0), 0.0).astype(jnp.float32)
    a_i8 = adj_f32.astype(jnp.int8)          # exact 0/1: half the HBM stream of bf16 A_norm

    in_feats = features.shape[1]
    finp0 = _round_up(in_feats, LANE)
    h = jnp.pad(features, ((0, 0), (0, finp0 - in_feats)))

    padded = []
    for w_self, w_neigh, bias in params:
        fin, fout = w_self.shape
        finp, foutp = _round_up(fin, LANE), _round_up(fout, LANE)
        padded.append((
            jnp.pad(w_self, ((0, finp - fin), (0, foutp - fout))),
            jnp.pad(w_neigh, ((0, finp - fin), (0, foutp - fout))),
            jnp.pad(bias, ((0, 0), (0, foutp - fout))),
        ))

    # ---- small graph: one fused pallas_call, everything VMEM resident ----
    if _fused_vmem_bytes(n, finp0, padded) <= max_fused_bytes:
        out = graphsage_fused(a_i8, inv_deg, h, padded)
        return out[:n, :out_feats]

    # ---- large graph: tiled two-kernel path ----
    n_pad = _round_up(n, LANE)
    if n_pad != n:
        a_i8 = jnp.pad(a_i8, ((0, n_pad - n), (0, n_pad - n)))
        inv_deg = jnp.pad(inv_deg, ((0, n_pad - n), (0, 0)))
        h = jnp.pad(h, ((0, n_pad - n), (0, 0)))

    # dest-node tile: keep >=2 blocks where possible so the parallel axis shards across v7x's 2 TCs
    tn_target = 512 if n_pad >= 1024 else max(LANE, n_pad // 2)
    tn = _pick_tile(n_pad, tn_target)
    tk = _pick_tile(n_pad, 2048)      # source-node (reduction) tile
    tp = _pick_tile(n_pad, 512)       # projection row tile

    for li, (ws, wn, b) in enumerate(padded):
        # TODO(synk): nn.Dropout between layers is identity in eval / deterministic forward; omitted.
        p = neighbor_projection(h, wn, tp=tp)                    # (n_pad, foutp) bf16
        foutp = wn.shape[1]
        resident_p = (n_pad * foutp * 2) <= max_resident_p_bytes
        h = sage_aggregate(
            a_i8, p, h, ws, b, inv_deg,
            apply_relu=(li != num_layers - 1),
            tn=tn, tk=tk, resident_p=resident_p,
        )
    return h[:n, :out_feats]


def graphsage_reference(adj, features, params):
    adj = adj.astype(jnp.float32)
    deg = adj.sum(axis=1, keepdims=True)
    a_norm = adj / jnp.maximum(deg, 1.0)
    h = features
    for li, (ws, wn, b) in enumerate(params):
        h = h @ ws + (a_norm @ h) @ wn + b
        if li != len(params) - 1:
            h = jnp.maximum(h, 0.0)
    return h


def make_params(key, in_feats, hid_feats, out_feats, nums_layers):
    """Deterministic SAGEConv params; weights stored as (Fin, Fout), i.e. W^T of nn.Linear."""
    dims = [in_feats] + [hid_feats] * nums_layers + [out_feats]
    params = []
    for fin, fout in zip(dims[:-1], dims[1:]):
        key, k1, k2 = jax.random.split(key, 3)
        scale = 1.0 / jnp.sqrt(jnp.float32(fin))
        w_self = jax.random.uniform(k1, (fin, fout), jnp.float32, -scale, scale)
        w_neigh = jax.random.uniform(k2, (fin, fout), jnp.float32, -scale, scale)
        bias = jnp.zeros((1, fout), jnp.float32)
        params.append((w_self, w_neigh, bias))
    return params


def make_graph(key, n_nodes, p_edge=0.05):
    """Deterministic random 0/1 adjacency without self loops."""
    adj = jax.random.bernoulli(key, p_edge, (n_nodes, n_nodes)).astype(jnp.float32)
    return adj * (1.0 - jnp.eye(n_nodes, dtype=jnp.float32))


if __name__ == "__main__":
    # Toy config matching the original DGL module usage.
    N = 128
    in_feats, hid_feats, out_feats, nums_layers = 32, 64, 16, 2  # nums_layers + 1 SAGEConv layers

    root = jax.random.PRNGKey(0)
    k_graph, k_feat, k_params = jax.random.split(root, 3)

    adj = make_graph(k_graph, N)
    features = jax.random.normal(k_feat, (N, in_feats), jnp.float32)
    params = make_params(k_params, in_feats, hid_feats, out_feats, nums_layers)

    # Small graph -> fully fused single-kernel path.
    out = jax.block_until_ready(graphsage_forward(adj, features, params))
    ref = graphsage_reference(adj, features, params)
    assert out.shape == (N, out_feats)
    assert jnp.allclose(out, ref, atol=2e-2, rtol=2e-2), float(jnp.max(jnp.abs(out - ref)))

    # Exercise the tiled (large-graph) path too: VMEM-resident P and streamed P variants.
    N2 = 512
    kg2, kf2 = jax.random.split(jax.random.PRNGKey(1))
    adj2 = make_graph(kg2, N2)
    feats2 = jax.random.normal(kf2, (N2, in_feats), jnp.float32)
    ref2 = graphsage_reference(adj2, feats2, params)

    out2a = jax.block_until_ready(
        graphsage_forward(adj2, feats2, params, max_fused_bytes=0))
    assert jnp.allclose(out2a, ref2, atol=2e-2, rtol=2e-2), float(jnp.max(jnp.abs(out2a - ref2)))

    out2b = jax.block_until_ready(
        graphsage_forward(adj2, feats2, params, max_fused_bytes=0, max_resident_p_bytes=0))
    assert jnp.allclose(out2b, ref2, atol=2e-2, rtol=2e-2), float(jnp.max(jnp.abs(out2b - ref2)))

    print("KERNEL_OK")
</pallas_src>

<mosaic_0001>
module attributes {stable_mosaic.version = 11 : i64} {
  func.func @_fused_kernel(%arg0: i32, %arg1: memref<128x128xi8, #tpu.memory_space<vmem>>, %arg2: memref<128x1xf32, #tpu.memory_space<vmem>>, %arg3: memref<128x128xf32, #tpu.memory_space<vmem>>, %arg4: memref<128x128xf32, #tpu.memory_space<vmem>>, %arg5: memref<128x128xf32, #tpu.memory_space<vmem>>, %arg6: memref<1x128xf32, #tpu.memory_space<vmem>>, %arg7: memref<128x128xf32, #tpu.memory_space<vmem>>, %arg8: memref<128x128xf32, #tpu.memory_space<vmem>>, %arg9: memref<1x128xf32, #tpu.memory_space<vmem>>, %arg10: memref<128x128xf32, #tpu.memory_space<vmem>>, %arg11: memref<128x128xf32, #tpu.memory_space<vmem>>, %arg12: memref<1x128xf32, #tpu.memory_space<vmem>>, %arg13: memref<128x128xf32, #tpu.memory_space<vmem>>) attributes {dimension_semantics = [#tpu.dimension_semantics<arbitrary>], iteration_bounds = array<i64: 1>, scalar_prefetch = 0 : i64, scratch_operands = 0 : i64, tpu.core_type = #tpu.core_type<tc>, window_params = [{pipeline_mode = #tpu.pipeline_mode<synchronous>, transform_indices = @transform_0, window_bounds = array<i64: 128, 128>}, {pipeline_mode = #tpu.pipeline_mode<synchronous>, transform_indices = @transform_1, window_bounds = array<i64: 128, 1>}, {pipeline_mode = #tpu.pipeline_mode<synchronous>, transform_indices = @transform_2, window_bounds = array<i64: 128, 128>}, {pipeline_mode = #tpu.pipeline_mode<synchronous>, transform_indices = @transform_3, window_bounds = array<i64: 128, 128>}, {pipeline_mode = #tpu.pipeline_mode<synchronous>, transform_indices = @transform_4, window_bounds = array<i64: 128, 128>}, {pipeline_mode = #tpu.pipeline_mode<synchronous>, transform_indices = @transform_5, window_bounds = array<i64: 1, 128>}, {pipeline_mode = #tpu.pipeline_mode<synchronous>, transform_indices = @transform_6, window_bounds = array<i64: 128, 128>}, {pipeline_mode = #tpu.pipeline_mode<synchronous>, transform_indices = @transform_7, window_bounds = array<i64: 128, 128>}, {pipeline_mode = #tpu.pipeline_mode<synchronous>, transform_indices = @transform_8, window_bounds = array<i64: 1, 128>}, {pipeline_mode = #tpu.pipeline_mode<synchronous>, transform_indices = @transform_9, window_bounds = array<i64: 128, 128>}, {pipeline_mode = #tpu.pipeline_mode<synchronous>, transform_indices = @transform_10, window_bounds = array<i64: 128, 128>}, {pipeline_mode = #tpu.pipeline_mode<synchronous>, transform_indices = @transform_11, window_bounds = array<i64: 1, 128>}, {pipeline_mode = #tpu.pipeline_mode<synchronous>, transform_indices = @transform_12, window_bounds = array<i64: 128, 128>}]} {
    %c0 = arith.constant 0 : index
    %c0_0 = arith.constant 0 : index
    %0 = vector.load %arg1[%c0, %c0_0] : memref<128x128xi8, #tpu.memory_space<vmem>>, vector<128x128xi8>
    %1 = arith.sitofp %0 : vector<128x128xi8> to vector<128x128xbf16>
    %c0_1 = arith.constant 0 : index
    %c0_2 = arith.constant 0 : index
    %2 = vector.load %arg2[%c0_1, %c0_2] : memref<128x1xf32, #tpu.memory_space<vmem>>, vector<128x1xf32>
    %c0_3 = arith.constant 0 : index
    %c0_4 = arith.constant 0 : index
    %3 = vector.load %arg3[%c0_3, %c0_4] : memref<128x128xf32, #tpu.memory_space<vmem>>, vector<128x128xf32>
    %c0_5 = arith.constant 0 : index
    %c0_6 = arith.constant 0 : index
    %4 = vector.load %arg4[%c0_5, %c0_6] : memref<128x128xf32, #tpu.memory_space<vmem>>, vector<128x128xf32>
    %c0_7 = arith.constant 0 : index
    %c0_8 = arith.constant 0 : index
    %5 = vector.load %arg5[%c0_7, %c0_8] : memref<128x128xf32, #tpu.memory_space<vmem>>, vector<128x128xf32>
    %c0_9 = arith.constant 0 : index
    %c0_10 = arith.constant 0 : index
    %6 = vector.load %arg6[%c0_9, %c0_10] : memref<1x128xf32, #tpu.memory_space<vmem>>, vector<1x128xf32>
    %cst = arith.constant dense<0.000000e+00> : vector<128x128xf32>
    %7 = tpu.matmul %3, %5, %cst {dimension_numbers = #tpu.dot_dimension_numbers<[1], [0], [0], [1], [0, 0, 1, 1], [], []>} : vector<128x128xf32>, vector<128x128xf32>, vector<128x128xf32> -> vector<128x128xf32>
    %8 = arith.truncf %7 : vector<128x128xf32> to vector<128x128xbf16>
    %cst_11 = arith.constant dense<0.000000e+00> : vector<128x128xf32>
    %9 = tpu.matmul %1, %8, %cst_11 {dimension_numbers = #tpu.dot_dimension_numbers<[1], [0], [0], [1], [0, 0, 1, 1], [], []>} : vector<128x128xbf16>, vector<128x128xbf16>, vector<128x128xf32> -> vector<128x128xf32>
    %10 = vector.broadcast %2 : vector<128x1xf32> to vector<128x128xf32>
    %11 = arith.mulf %9, %10 : vector<128x128xf32>
    %cst_12 = arith.constant dense<0.000000e+00> : vector<128x128xf32>
    %12 = tpu.matmul %3, %4, %cst_12 {dimension_numbers = #tpu.dot_dimension_numbers<[1], [0], [0], [1], [0, 0, 1, 1], [], []>} : vector<128x128xf32>, vector<128x128xf32>, vector<128x128xf32> -> vector<128x128xf32>
    %13 = arith.addf %12, %11 : vector<128x128xf32>
    %14 = vector.broadcast %6 : vector<1x128xf32> to vector<128x128xf32>
    %15 = arith.addf %13, %14 : vector<128x128xf32>
    %cst_13 = arith.constant 0.000000e+00 : f32
    %16 = vector.broadcast %cst_13 : f32 to vector<128x128xf32>
    %17 = arith.maximumf %15, %16 : vector<128x128xf32>
    %c0_14 = arith.constant 0 : index
    %c0_15 = arith.constant 0 : index
    %18 = vector.load %arg7[%c0_14, %c0_15] : memref<128x128xf32, #tpu.memory_space<vmem>>, vector<128x128xf32>
    %c0_16 = arith.constant 0 : index
    %c0_17 = arith.constant 0 : index
    %19 = vector.load %arg8[%c0_16, %c0_17] : memref<128x128xf32, #tpu.memory_space<vmem>>, vector<128x128xf32>
    %c0_18 = arith.constant 0 : index
    %c0_19 = arith.constant 0 : index
    %20 = vector.load %arg9[%c0_18, %c0_19] : memref<1x128xf32, #tpu.memory_space<vmem>>, vector<1x128xf32>
    %cst_20 = arith.constant dense<0.000000e+00> : vector<128x128xf32>
    %21 = tpu.matmul %17, %19, %cst_20 {dimension_numbers = #tpu.dot_dimension_numbers<[1], [0], [0], [1], [0, 0, 1, 1], [], []>} : vector<128x128xf32>, vector<128x128xf32>, vector<128x128xf32> -> vector<128x128xf32>
    %22 = arith.truncf %21 : vector<128x128xf32> to vector<128x128xbf16>
    %cst_21 = arith.constant dense<0.000000e+00> : vector<128x128xf32>
    %23 = tpu.matmul %1, %22, %cst_21 {dimension_numbers = #tpu.dot_dimension_numbers<[1], [0], [0], [1], [0, 0, 1, 1], [], []>} : vector<128x128xbf16>, vector<128x128xbf16>, vector<128x128xf32> -> vector<128x128xf32>
    %24 = vector.broadcast %2 : vector<128x1xf32> to vector<128x128xf32>
    %25 = arith.mulf %23, %24 : vector<128x128xf32>
    %cst_22 = arith.constant dense<0.000000e+00> : vector<128x128xf32>
    %26 = tpu.matmul %17, %18, %cst_22 {dimension_numbers = #tpu.dot_dimension_numbers<[1], [0], [0], [1], [0, 0, 1, 1], [], []>} : vector<128x128xf32>, vector<128x128xf32>, vector<128x128xf32> -> vector<128x128xf32>
    %27 = arith.addf %26, %25 : vector<128x128xf32>
    %28 = vector.broadcast %20 : vector<1x128xf32> to vector<128x128xf32>
    %29 = arith.addf %27, %28 : vector<128x128xf32>
    %cst_23 = arith.constant 0.000000e+00 : f32
    %30 = vector.broadcast %cst_23 : f32 to vector<128x128xf32>
    %31 = arith.maximumf %29, %30 : vector<128x128xf32>
    %c0_24 = arith.constant 0 : index
    %c0_25 = arith.constant 0 : index
    %32 = vector.load %arg10[%c0_24, %c0_25] : memref<128x128xf32, #tpu.memory_space<vmem>>, vector<128x128xf32>
    %c0_26 = arith.constant 0 : index
    %c0_27 = arith.constant 0 : index
    %33 = vector.load %arg11[%c0_26, %c0_27] : memref<128x128xf32, #tpu.memory_space<vmem>>, vector<128x128xf32>
    %c0_28 = arith.constant 0 : index
    %c0_29 = arith.constant 0 : index
    %34 = vector.load %arg12[%c0_28, %c0_29] : memref<1x128xf32, #tpu.memory_space<vmem>>, vector<1x128xf32>
    %cst_30 = arith.constant dense<0.000000e+00> : vector<128x128xf32>
    %35 = tpu.matmul %31, %33, %cst_30 {dimension_numbers = #tpu.dot_dimension_numbers<[1], [0], [0], [1], [0, 0, 1, 1], [], []>} : vector<128x128xf32>, vector<128x128xf32>, vector<128x128xf32> -> vector<128x128xf32>
    %36 = arith.truncf %35 : vector<128x128xf32> to vector<128x128xbf16>
    %cst_31 = arith.constant dense<0.000000e+00> : vector<128x128xf32>
    %37 = tpu.matmul %1, %36, %cst_31 {dimension_numbers = #tpu.dot_dimension_numbers<[1], [0], [0], [1], [0, 0, 1, 1], [], []>} : vector<128x128xbf16>, vector<128x128xbf16>, vector<128x128xf32> -> vector<128x128xf32>
    %38 = vector.broadcast %2 : vector<128x1xf32> to vector<128x128xf32>
    %39 = arith.mulf %37, %38 : vector<128x128xf32>
    %cst_32 = arith.constant dense<0.000000e+00> : vector<128x128xf32>
    %40 = tpu.matmul %31, %32, %cst_32 {dimension_numbers = #tpu.dot_dimension_numbers<[1], [0], [0], [1], [0, 0, 1, 1], [], []>} : vector<128x128xf32>, vector<128x128xf32>, vector<128x128xf32> -> vector<128x128xf32>
    %41 = arith.addf %40, %39 : vector<128x128xf32>
    %42 = vector.broadcast %34 : vector<1x128xf32> to vector<128x128xf32>
    %43 = arith.addf %41, %42 : vector<128x128xf32>
    %c0_33 = arith.constant 0 : index
    %c0_34 = arith.constant 0 : index
    %44 = vector.load %arg13[%c0_33, %c0_34] : memref<128x128xf32, #tpu.memory_space<vmem>>, vector<128x128xf32>
    tpu.vector_store %arg13[%c0_33, %c0_34], %43 {strides = array<i32>} : memref<128x128xf32, #tpu.memory_space<vmem>>, vector<128x128xf32>,
    return
  }
  func.func @transform_0(%arg0: i32) -> (i32, i32) {
    %c0_i32 = arith.constant 0 : i32
    %c0_i32_0 = arith.constant 0 : i32
    %c0_i32_1 = arith.constant 0 : i32
    return %c0_i32, %c0_i32_0 : i32, i32
  }
  func.func @transform_1(%arg0: i32) -> (i32, i32) {
    %c0_i32 = arith.constant 0 : i32
    %c0_i32_0 = arith.constant 0 : i32
    %c0_i32_1 = arith.constant 0 : i32
    return %c0_i32, %c0_i32_0 : i32, i32
  }
  func.func @transform_2(%arg0: i32) -> (i32, i32) {
    %c0_i32 = arith.constant 0 : i32
    %c0_i32_0 = arith.constant 0 : i32
    %c0_i32_1 = arith.constant 0 : i32
    return %c0_i32, %c0_i32_0 : i32, i32
  }
  func.func @transform_3(%arg0: i32) -> (i32, i32) {
    %c0_i32 = arith.constant 0 : i32
    %c0_i32_0 = arith.constant 0 : i32
    %c0_i32_1 = arith.constant 0 : i32
    return %c0_i32, %c0_i32_0 : i32, i32
  }
  func.func @transform_4(%arg0: i32) -> (i32, i32) {
    %c0_i32 = arith.constant 0 : i32
    %c0_i32_0 = arith.constant 0 : i32
    %c0_i32_1 = arith.constant 0 : i32
    return %c0_i32, %c0_i32_0 : i32, i32
  }
  func.func @transform_5(%arg0: i32) -> (i32, i32) {
    %c0_i32 = arith.constant 0 : i32
    %c0_i32_0 = arith.constant 0 : i32
    %c0_i32_1 = arith.constant 0 : i32
    return %c0_i32, %c0_i32_0 : i32, i32
  }
  func.func @transform_6(%arg0: i32) -> (i32, i32) {
    %c0_i32 = arith.constant 0 : i32
    %c0_i32_0 = arith.constant 0 : i32
    %c0_i32_1 = arith.constant 0 : i32
    return %c0_i32, %c0_i32_0 : i32, i32
  }
  func.func @transform_7(%arg0: i32) -> (i32, i32) {
    %c0_i32 = arith.constant 0 : i32
    %c0_i32_0 = arith.constant 0 : i32
    %c0_i32_1 = arith.constant 0 : i32
    return %c0_i32, %c0_i32_0 : i32, i32
  }
  func.func @transform_8(%arg0: i32) -> (i32, i32) {
    %c0_i32 = arith.constant 0 : i32
    %c0_i32_0 = arith.constant 0 : i32
    %c0_i32_1 = arith.constant 0 : i32
    return %c0_i32, %c0_i32_0 : i32, i32
  }
  func.func @transform_9(%arg0: i32) -> (i32, i32) {
    %c0_i32 = arith.constant 0 : i32
    %c0_i32_0 = arith.constant 0 : i32
    %c0_i32_1 = arith.constant 0 : i32
    return %c0_i32, %c0_i32_0 : i32, i32
  }
  func.func @transform_10(%arg0: i32) -> (i32, i32) {
    %c0_i32 = arith.constant 0 : i32
    %c0_i32_0 = arith.constant 0 : i32
    %c0_i32_1 = arith.constant 0 : i32
    return %c0_i32, %c0_i32_0 : i32, i32
  }
  func.func @transform_11(%arg0: i32) -> (i32, i32) {
    %c0_i32 = arith.constant 0 : i32
    %c0_i32_0 = arith.constant 0 : i32
    %c0_i32_1 = arith.constant 0 : i32
    return %c0_i32, %c0_i32_0 : i32, i32
  }
  func.func @transform_12(%arg0: i32) -> (i32, i32) {
    %c0_i32 = arith.constant 0 : i32
    %c0_i32_0 = arith.constant 0 : i32
    %c0_i32_1 = arith.constant 0 : i32
    return %c0_i32, %c0_i32_0 : i32, i32
  }
}

</mosaic_0001>

<llo_original>
// kernel: tpu_custom_call.1
$region0: #{tpu_custom_call.1}
  #allocation0 [shape = 'u32[]', space=smem, size = 0x4, offset = 0x4, fixed_abs, tag = 'smem constant byte address 0x4 - core index']
  #allocation1 [shape = 'u32[144,128]{1,0:T(1,128)}', space=vmem, size = 0x12000, scoped, tag = 'internal scratch']
  %s0 = inlined_call_operand.hbm [shape: s8[128,128], index: 0, kind: input, shape index: {}]
  %s1 = inlined_call_operand.vmem [shape: f32[128,1], index: 1, kind: input, shape index: {}]
  %s2 = inlined_call_operand.vmem [shape: f32[128,128], index: 2, kind: input, shape index: {}]
  %s3 = inlined_call_operand.hbm [shape: f32[128,128], index: 3, kind: input, shape index: {}]
  %s4 = inlined_call_operand.hbm [shape: f32[128,128], index: 4, kind: input, shape index: {}]
  %s5 = inlined_call_operand.vmem [shape: f32[1,128], index: 5, kind: input, shape index: {}]
  %s6 = inlined_call_operand.hbm [shape: f32[128,128], index: 6, kind: input, shape index: {}]
  %s7 = inlined_call_operand.hbm [shape: f32[128,128], index: 7, kind: input, shape index: {}]
  %s8 = inlined_call_operand.vmem [shape: f32[1,128], index: 8, kind: input, shape index: {}]
  %s9 = inlined_call_operand.hbm [shape: f32[128,128], index: 9, kind: input, shape index: {}]
  %s10 = inlined_call_operand.hbm [shape: f32[128,128], index: 10, kind: input, shape index: {}]
  %s11 = inlined_call_operand.vmem [shape: f32[1,128], index: 11, kind: input, shape index: {}]
  %s12 = inlined_call_operand.hbm [shape: f32[128,128], index: 12, kind: output, shape index: {}]
  %s13 = sld [smem:[#allocation0]]
  $region86: #{tpu_custom_call.1} parent=0
    _
  %s15 = ssub.s32 1, %s13
  %s16 = scalar_select 0, %s15, %s13
  $region1: #{tpu_custom_call.1} parent=0
    #allocation2 [shape = 'u8[16384]{0}', space=vmem, size = 0x4000, scoped, tag = 'input window, operand 0, single buffered']
    #allocation3 [shape = 's32[1]{0}', space=sflag, size = 0x4, scoped, tag = 'scoped memory for tpu_custom_call.1']
    #allocation4 [shape = 's32[1]{0}', space=sflag, size = 0x4, scoped, tag = 'scoped memory for tpu_custom_call.1']
    #allocation5 [shape = 'u8[65536]{0}', space=vmem, size = 0x10000, scoped, tag = 'input window, operand 3, single buffered']
    #allocation6 [shape = 's32[1]{0}', space=sflag, size = 0x4, scoped, tag = 'scoped memory for tpu_custom_call.1']
    #allocation7 [shape = 'u8[65536]{0}', space=vmem, size = 0x10000, scoped, tag = 'input window, operand 4, single buffered']
    #allocation8 [shape = 'u8[65536]{0}', space=vmem, size = 0x10000, scoped, tag = 'input window, operand 6, single buffered']
    #allocation9 [shape = 's32[1]{0}', space=sflag, size = 0x4, scoped, tag = 'scoped memory for tpu_custom_call.1']
    #allocation10 [shape = 'u8[65536]{0}', space=vmem, size = 0x10000, scoped, tag = 'input window, operand 7, single buffered']
    #allocation11 [shape = 'u8[65536]{0}', space=vmem, size = 0x10000, scoped, tag = 'input window, operand 9, single buffered']
    #allocation12 [shape = 's32[1]{0}', space=sflag, size = 0x4, scoped, tag = 'scoped memory for tpu_custom_call.1']
    #allocation13 [shape = 'u8[65536]{0}', space=vmem, size = 0x10000, scoped, tag = 'input window, operand 10, single buffered']
    #allocation14 [shape = 'u8[65536]{0}', space=vmem, size = 0x10000, scoped, tag = 'output window, operand 0, single buffered']
    %17 = vsyncpa [#allocation3], 0
    %18 = vsyncpa [#allocation6], 0
    %19 = vsyncpa [#allocation9], 0
    %20 = vsyncpa [#allocation12], 0
    %21 = vsyncpa [#allocation4], 0
    // Predicated region
    $region2: #{tpu_custom_call.1} parent=1 // pred_check
      _
    $region3: #{tpu_custom_call.1} parent=1 // pred_check_branch
      %23 = sbr.rel (0) target = $region5
    $region4: #{tpu_custom_call.1} parent=1 // pred_region
      %s25 = ssub.s32 512, 512
      %26 = vsyncadd [#allocation3], %s25
      %s27 = sshll.u32 [#allocation2], 4
      %s28 = int_to_ptr.vmem [resolvable:$true] %s27
      %33 = dma.hbm_to_vmem [thread:$0]  %s0, 512, %s28, [#allocation3], 128, 128, 8
    $region5: #{tpu_custom_call.1} parent=1 // pred_fallthru
      _
    // Predicated region
    $region6: #{tpu_custom_call.1} parent=1 // pred_check
      _
    $region7: #{tpu_custom_call.1} parent=1 // pred_check_branch
      %35 = sbr.rel (0) target = $region9
    $region8: #{tpu_custom_call.1} parent=1 // pred_region
      _
    $region9: #{tpu_custom_call.1} parent=1 // pred_fallthru
      _
    // Predicated region
    $region10: #{tpu_custom_call.1} parent=1 // pred_check
      _
    $region11: #{tpu_custom_call.1} parent=1 // pred_check_branch
      %37 = sbr.rel (0) target = $region13
    $region12: #{tpu_custom_call.1} parent=1 // pred_region
      _
    $region13: #{tpu_custom_call.1} parent=1 // pred_fallthru
      _
    // Predicated region
    $region14: #{tpu_custom_call.1} parent=1 // pred_check
      _
    $region15: #{tpu_custom_call.1} parent=1 // pred_check_branch
      %39 = sbr.rel (0) target = $region17
    $region16: #{tpu_custom_call.1} parent=1 // pred_region
      %s41 = ssub.s32 2048, 2048
      %42 = vsyncadd [#allocation6], %s41
      %s43 = sshll.u32 [#allocation5], 4
      %s44 = int_to_ptr.vmem [resolvable:$true] %s43
      %49 = dma.hbm_to_vmem [thread:$0]  %s3, 2048, %s44, [#allocation6], 128, 128, 8
    $region17: #{tpu_custom_call.1} parent=1 // pred_fallthru
      _
    // Predicated region
    $region18: #{tpu_custom_call.1} parent=1 // pred_check
      _
    $region19: #{tpu_custom_call.1} parent=1 // pred_check_branch
      %51 = sbr.rel (0) target = $region21
    $region20: #{tpu_custom_call.1} parent=1 // pred_region
      %s53 = ssub.s32 2048, 2048
      %54 = vsyncadd [#allocation6], %s53
      %s55 = sshll.u32 [#allocation7], 4
      %s56 = int_to_ptr.vmem [resolvable:$true] %s55
      %61 = dma.hbm_to_vmem [thread:$0]  %s4, 2048, %s56, [#allocation6], 128, 128, 8
    $region21: #{tpu_custom_call.1} parent=1 // pred_fallthru
      _
    // Predicated region
    $region22: #{tpu_custom_call.1} parent=1 // pred_check
      _
    $region23: #{tpu_custom_call.1} parent=1 // pred_check_branch
      %63 = sbr.rel (0) target = $region25
    $region24: #{tpu_custom_call.1} parent=1 // pred_region
      _
    $region25: #{tpu_custom_call.1} parent=1 // pred_fallthru
      _
    // Predicated region
    $region26: #{tpu_custom_call.1} parent=1 // pred_check
      _
    $region27: #{tpu_custom_call.1} parent=1 // pred_check_branch
      %65 = sbr.rel (0) target = $region29
    $region28: #{tpu_custom_call.1} parent=1 // pred_region
      %s67 = ssub.s32 2048, 2048
      %68 = vsyncadd [#allocation9], %s67
      %s69 = sshll.u32 [#allocation8], 4
      %s70 = int_to_ptr.vmem [resolvable:$true] %s69
      %75 = dma.hbm_to_vmem [thread:$0]  %s6, 2048, %s70, [#allocation9], 128, 128, 8
    $region29: #{tpu_custom_call.1} parent=1 // pred_fallthru
      _
    // Predicated region
    $region30: #{tpu_custom_call.1} parent=1 // pred_check
      _
    $region31: #{tpu_custom_call.1} parent=1 // pred_check_branch
      %77 = sbr.rel (0) target = $region33
    $region32: #{tpu_custom_call.1} parent=1 // pred_region
      %s79 = ssub.s32 2048, 2048
      %80 = vsyncadd [#allocation9], %s79
      %s81 = sshll.u32 [#allocation10], 4
      %s82 = int_to_ptr.vmem [resolvable:$true] %s81
      %87 = dma.hbm_to_vmem [thread:$0]  %s7, 2048, %s82, [#allocation9], 128, 128, 8
    $region33: #{tpu_custom_call.1} parent=1 // pred_fallthru
      _
    // Predicated region
    $region34: #{tpu_custom_call.1} parent=1 // pred_check
      _
    $region35: #{tpu_custom_call.1} parent=1 // pred_check_branch
      %89 = sbr.rel (0) target = $region37
    $region36: #{tpu_custom_call.1} parent=1 // pred_region
      _
    $region37: #{tpu_custom_call.1} parent=1 // pred_fallthru
      _
    // Predicated region
    $region38: #{tpu_custom_call.1} parent=1 // pred_check
      _
    $region39: #{tpu_custom_call.1} parent=1 // pred_check_branch
      %91 = sbr.rel (0) target = $region41
    $region40: #{tpu_custom_call.1} parent=1 // pred_region
      %s93 = ssub.s32 2048, 2048
      %94 = vsyncadd [#allocation12], %s93
      %s95 = sshll.u32 [#allocation11], 4
      %s96 = int_to_ptr.vmem [resolvable:$true] %s95
      %101 = dma.hbm_to_vmem [thread:$0]  %s9, 2048, %s96, [#allocation12], 128, 128, 8
    $region41: #{tpu_custom_call.1} parent=1 // pred_fallthru
      _
    // Predicated region
    $region42: #{tpu_custom_call.1} parent=1 // pred_check
      _
    $region43: #{tpu_custom_call.1} parent=1 // pred_check_branch
      %103 = sbr.rel (0) target = $region45
    $region44: #{tpu_custom_call.1} parent=1 // pred_region
      %s105 = ssub.s32 2048, 2048
      %106 = vsyncadd [#allocation12], %s105
      %s107 = sshll.u32 [#allocation13], 4
      %s108 = int_to_ptr.vmem [resolvable:$true] %s107
      %113 = dma.hbm_to_vmem [thread:$0]  %s10, 2048, %s108, [#allocation12], 128, 128, 8
    $region45: #{tpu_custom_call.1} parent=1 // pred_fallthru
      _
    // Predicated region
    $region46: #{tpu_custom_call.1} parent=1 // pred_check
      _
    $region47: #{tpu_custom_call.1} parent=1 // pred_check_branch
      %115 = sbr.rel (0) target = $region49
    $region48: #{tpu_custom_call.1} parent=1 // pred_region
      _
    $region49: #{tpu_custom_call.1} parent=1 // pred_fallthru
      _
    // Predicated region
    $region50: #{tpu_custom_call.1} parent=1 // pred_check
      _
    $region51: #{tpu_custom_call.1} parent=1 // pred_check_branch
      %117 = sbr.rel (0) target = $region53
    $region52: #{tpu_custom_call.1} parent=1 // pred_region
      %118 = dma.done [#allocation3], 512
    $region53: #{tpu_custom_call.1} parent=1 // pred_fallthru
      _
    // Predicated region
    $region54: #{tpu_custom_call.1} parent=1 // pred_check
      _
    $region55: #{tpu_custom_call.1} parent=1 // pred_check_branch
      %120 = sbr.rel (0) target = $region57
    $region56: #{tpu_custom_call.1} parent=1 // pred_region
      %121 = dma.done [#allocation6], 2048
    $region57: #{tpu_custom_call.1} parent=1 // pred_fallthru
      _
    // Predicated region
    $region58: #{tpu_custom_call.1} parent=1 // pred_check
      _
    $region59: #{tpu_custom_call.1} parent=1 // pred_check_branch
      %123 = sbr.rel (0) target = $region61
    $region60: #{tpu_custom_call.1} parent=1 // pred_region
      %124 = dma.done [#allocation6], 2048
    $region61: #{tpu_custom_call.1} parent=1 // pred_fallthru
      _
    // Predicated region
    $region62: #{tpu_custom_call.1} parent=1 // pred_check
      _
    $region63: #{tpu_custom_call.1} parent=1 // pred_check_branch
      %126 = sbr.rel (0) target = $region65
    $region64: #{tpu_custom_call.1} parent=1 // pred_region
      %127 = dma.done [#allocation9], 2048
    $region65: #{tpu_custom_call.1} parent=1 // pred_fallthru
      _
    // Predicated region
    $region66: #{tpu_custom_call.1} parent=1 // pred_check
      _
    $region67: #{tpu_custom_call.1} parent=1 // pred_check_branch
      %129 = sbr.rel (0) target = $region69
    $region68: #{tpu_custom_call.1} parent=1 // pred_region
      %130 = dma.done [#allocation9], 2048
    $region69: #{tpu_custom_call.1} parent=1 // pred_fallthru
      _
    // Predicated region
    $region70: #{tpu_custom_call.1} parent=1 // pred_check
      _
    $region71: #{tpu_custom_call.1} parent=1 // pred_check_branch
      %132 = sbr.rel (0) target = $region73
    $region72: #{tpu_custom_call.1} parent=1 // pred_region
      %133 = dma.done [#allocation12], 2048
    $region73: #{tpu_custom_call.1} parent=1 // pred_fallthru
      _
    // Predicated region
    $region74: #{tpu_custom_call.1} parent=1 // pred_check
      _
    $region75: #{tpu_custom_call.1} parent=1 // pred_check_branch
      %135 = sbr.rel (0) target = $region77
    $region76: #{tpu_custom_call.1} parent=1 // pred_region
      %136 = dma.done [#allocation12], 2048
    $region77: #{tpu_custom_call.1} parent=1 // pred_fallthru
      _
    %v138 = vld [vmem:[#allocation2] sm:$0xff]
    %v139 = vld [vmem:[#allocation2 + $0x8] sm:$0xff]
    %v140 = vld [vmem:[#allocation2 + $0x10] sm:$0xff]
    %v141 = vld [vmem:[#allocation2 + $0x18] sm:$0xff]
    %v142 = vunpack.c.l.s8.bf16 %v138
    %v143 = vunpack.c.h.s8.bf16 %v138
    %v144 = vunpack.c.l.s8.bf16 %v139
    %v145 = vunpack.c.h.s8.bf16 %v139
    %v146 = vunpack.c.l.s8.bf16 %v140
    %v147 = vunpack.c.h.s8.bf16 %v140
    %v148 = vunpack.c.l.s8.bf16 %v141
    %v149 = vunpack.c.h.s8.bf16 %v141
    %v150 = vld [vmem:[%s1] sm:$0xff]
    %v151 = vld [vmem:[%s1 + $0x8] sm:$0xff]
    %v152 = vld [vmem:[%s1 + $0x10] sm:$0xff]
    %v153 = vld [vmem:[%s1 + $0x18] sm:$0xff]
    %v154 = vld [vmem:[%s1 + $0x20] sm:$0xff]
    %v155 = vld [vmem:[%s1 + $0x28] sm:$0xff]
    %v156 = vld [vmem:[%s1 + $0x30] sm:$0xff]
    %v157 = vld [vmem:[%s1 + $0x38] sm:$0xff]
    %v158 = vld [vmem:[%s1 + $0x40] sm:$0xff]
    %v159 = vld [vmem:[%s1 + $0x48] sm:$0xff]
    %v160 = vld [vmem:[%s1 + $0x50] sm:$0xff]
    %v161 = vld [vmem:[%s1 + $0x58] sm:$0xff]
    %v162 = vld [vmem:[%s1 + $0x60] sm:$0xff]
    %v163 = vld [vmem:[%s1 + $0x68] sm:$0xff]
    %v164 = vld [vmem:[%s1 + $0x70] sm:$0xff]
    %v165 = vld [vmem:[%s1 + $0x78] sm:$0xff]
    %v166 = vld [vmem:[%s2] sm:$0xff]
    %v167 = vld [vmem:[%s2 + $0x8] sm:$0xff]
    %v168 = vld [vmem:[%s2 + $0x10] sm:$0xff]
    %v169 = vld [vmem:[%s2 + $0x18] sm:$0xff]
    %v170 = vld [vmem:[%s2 + $0x20] sm:$0xff]
    %v171 = vld [vmem:[%s2 + $0x28] sm:$0xff]
    %v172 = vld [vmem:[%s2 + $0x30] sm:$0xff]
    %v173 = vld [vmem:[%s2 + $0x38] sm:$0xff]
    %v174 = vld [vmem:[%s2 + $0x40] sm:$0xff]
    %v175 = vld [vmem:[%s2 + $0x48] sm:$0xff]
    %v176 = vld [vmem:[%s2 + $0x50] sm:$0xff]
    %v177 = vld [vmem:[%s2 + $0x58] sm:$0xff]
    %v178 = vld [vmem:[%s2 + $0x60] sm:$0xff]
    %v179 = vld [vmem:[%s2 + $0x68] sm:$0xff]
    %v180 = vld [vmem:[%s2 + $0x70] sm:$0xff]
    %v181 = vld [vmem:[%s2 + $0x78] sm:$0xff]
    %v182 = vld [vmem:[#allocation5] sm:$0xff]
    %v183 = vld [vmem:[#allocation5 + $0x8] sm:$0xff]
    %v184 = vld [vmem:[#allocation5 + $0x10] sm:$0xff]
    %v185 = vld [vmem:[#allocation5 + $0x18] sm:$0xff]
    %v186 = vld [vmem:[#allocation5 + $0x20] sm:$0xff]
    %v187 = vld [vmem:[#allocation5 + $0x28] sm:$0xff]
    %v188 = vld [vmem:[#allocation5 + $0x30] sm:$0xff]
    %v189 = vld [vmem:[#allocation5 + $0x38] sm:$0xff]
    %v190 = vld [vmem:[#allocation5 + $0x40] sm:$0xff]
    %v191 = vld [vmem:[#allocation5 + $0x48] sm:$0xff]
    %v192 = vld [vmem:[#allocation5 + $0x50] sm:$0xff]
    %v193 = vld [vmem:[#allocation5 + $0x58] sm:$0xff]
    %v194 = vld [vmem:[#allocation5 + $0x60] sm:$0xff]
    %v195 = vld [vmem:[#allocation5 + $0x68] sm:$0xff]
    %v196 = vld [vmem:[#allocation5 + $0x70] sm:$0xff]
    %v197 = vld [vmem:[#allocation5 + $0x78] sm:$0xff]
    %v198 = vld [vmem:[#allocation7] sm:$0xff]
    %v199 = vld [vmem:[#allocation7 + $0x8] sm:$0xff]
    %v200 = vld [vmem:[#allocation7 + $0x10] sm:$0xff]
    %v201 = vld [vmem:[#allocation7 + $0x18] sm:$0xff]
    %v202 = vld [vmem:[#allocation7 + $0x20] sm:$0xff]
    %v203 = vld [vmem:[#allocation7 + $0x28] sm:$0xff]
    %v204 = vld [vmem:[#allocation7 + $0x30] sm:$0xff]
    %v205 = vld [vmem:[#allocation7 + $0x38] sm:$0xff]
    %v206 = vld [vmem:[#allocation7 + $0x40] sm:$0xff]
    %v207 = vld [vmem:[#allocation7 + $0x48] sm:$0xff]
    %v208 = vld [vmem:[#allocation7 + $0x50] sm:$0xff]
    %v209 = vld [vmem:[#allocation7 + $0x58] sm:$0xff]
    %v210 = vld [vmem:[#allocation7 + $0x60] sm:$0xff]
    %v211 = vld [vmem:[#allocation7 + $0x68] sm:$0xff]
    %v212 = vld [vmem:[#allocation7 + $0x70] sm:$0xff]
    %v213 = vld [vmem:[#allocation7 + $0x78] sm:$0xff]
    %v214 = vld [vmem:[%s5] sm:$0x1]
    %215 = vmatprep.subr.mxu0 0.0
    %216 = vmatpush1.msra.mxu0 %v198
    %217 = vmatprep.subr.mxu0 0.0
    %218 = vmatpush1.msra.mxu0 %v199
    %219 = vmatprep.subr.mxu0 0.0
    %220 = vmatpush1.msra.mxu0 %v200
    %221 = vmatprep.subr.mxu0 0.0
    %222 = vmatpush1.msra.mxu0 %v201
    %223 = vmatprep.subr.mxu0 0.0
    %224 = vmatpush1.msra.mxu0 %v202
    %225 = vmatprep.subr.mxu0 0.0
    %226 = vmatpush1.msra.mxu0 %v203
    %227 = vmatprep.subr.mxu0 0.0
    %228 = vmatpush1.msra.mxu0 %v204
    %229 = vmatprep.subr.mxu0 0.0
    %230 = vmatpush1.msra.mxu0 %v205
    %231 = vmatprep.subr.mxu0 0.0
    %232 = vmatpush1.msra.mxu0 %v206
    %233 = vmatprep.subr.mxu0 0.0
    %234 = vmatpush1.msra.mxu0 %v207
    %235 = vmatprep.subr.mxu0 0.0
    %236 = vmatpush1.msra.mxu0 %v208
    %237 = vmatprep.subr.mxu0 0.0
    %238 = vmatpush1.msra.mxu0 %v209
    %239 = vmatprep.subr.mxu0 0.0
    %240 = vmatpush1.msra.mxu0 %v210
    %241 = vmatprep.subr.mxu0 0.0
    %242 = vmatpush1.msra.mxu0 %v211
    %243 = vmatprep.subr.mxu0 0.0
    %244 = vmatpush1.msra.mxu0 %v212
    %245 = vmatprep.subr.mxu0 0.0
    %246 = vmatpush1.msra.mxu0 %v213
    %247 = vmatprep.subr.mxu0 0.0
    %248 = vmatpush1.msra.mxu0 0.0
    %249 = vmatprep.subr.mxu0 0.0
    %250 = vmatpush1.msra.mxu0 0.0
    %251 = vmatprep.subr.mxu0 0.0
    %252 = vmatpush1.msra.mxu0 0.0
    %253 = vmatprep.subr.mxu0 0.0
    %254 = vmatpush1.msra.mxu0 0.0
    %255 = vmatprep.subr.mxu0 0.0
    %256 = vmatpush1.msra.mxu0 0.0
    %257 = vmatprep.subr.mxu0 0.0
    %258 = vmatpush1.msra.mxu0 0.0
    %259 = vmatprep.subr.mxu0 0.0
    %260 = vmatpush1.msra.mxu0 0.0
    %261 = vmatprep.subr.mxu0 0.0
    %262 = vmatpush1.msra.mxu0 0.0
    %263 = vmatprep.subr.mxu0 0.0
    %264 = vmatpush1.msra.mxu0 0.0
    %265 = vmatprep.subr.mxu0 0.0
    %266 = vmatpush1.msra.mxu0 0.0
    %267 = vmatprep.subr.mxu0 0.0
    %268 = vmatpush1.msra.mxu0 0.0
    %269 = vmatprep.subr.mxu0 0.0
    %270 = vmatpush1.msra.mxu0 0.0
    %271 = vmatprep.subr.mxu0 0.0
    %272 = vmatpush1.msra.mxu0 0.0
    %273 = vmatprep.subr.mxu0 0.0
    %274 = vmatpush1.msra.mxu0 0.0
    %275 = vmatprep.subr.mxu0 0.0
    %276 = vmatpush1.msra.mxu0 0.0
    %277 = vmatprep.subr.mxu0 0.0
    %278 = vmatpush1.msra.mxu0 0.0
    %279 = vmatprep.mubr.f32.mxu0 0.0
    %280 = vmatmul.mubr.f32.gmra.mrb[0].mxu0 %v166
    %v281 = vpop.f32.mrb[0].mxu0
    %v282 = vadd.f32 0.0, %v281
    %v283 = vpop.f32.mrb[0].mxu0
    %284 = vmatprep.mubr.f32.mxu0 0.0
    %285 = vmatmul.mubr.f32.gmra.mrb[0].mxu0 %v167
    %v286 = vpop.f32.mrb[0].mxu0
    %v287 = vadd.f32 0.0, %v286
    %v288 = vpop.f32.mrb[0].mxu0
    %289 = vmatprep.mubr.f32.mxu0 0.0
    %290 = vmatmul.mubr.f32.gmra.mrb[0].mxu0 %v168
    %v291 = vpop.f32.mrb[0].mxu0
    %v292 = vadd.f32 0.0, %v291
    %v293 = vpop.f32.mrb[0].mxu0
    %294 = vmatprep.mubr.f32.mxu0 0.0
    %295 = vmatmul.mubr.f32.gmra.mrb[0].mxu0 %v169
    %v296 = vpop.f32.mrb[0].mxu0
    %v297 = vadd.f32 0.0, %v296
    %v298 = vpop.f32.mrb[0].mxu0
    %299 = vmatprep.mubr.f32.mxu0 0.0
    %300 = vmatmul.mubr.f32.gmra.mrb[0].mxu0 %v170
    %v301 = vpop.f32.mrb[0].mxu0
    %v302 = vadd.f32 0.0, %v301
    %v303 = vpop.f32.mrb[0].mxu0
    %304 = vmatprep.mubr.f32.mxu0 0.0
    %305 = vmatmul.mubr.f32.gmra.mrb[0].mxu0 %v171
    %v306 = vpop.f32.mrb[0].mxu0
    %v307 = vadd.f32 0.0, %v306
    %v308 = vpop.f32.mrb[0].mxu0
    %309 = vmatprep.mubr.f32.mxu0 0.0
    %310 = vmatmul.mubr.f32.gmra.mrb[0].mxu0 %v172
    %v311 = vpop.f32.mrb[0].mxu0
    %v312 = vadd.f32 0.0, %v311
    %v313 = vpop.f32.mrb[0].mxu0
    %314 = vmatprep.mubr.f32.mxu0 0.0
    %315 = vmatmul.mubr.f32.gmra.mrb[0].mxu0 %v173
    %v316 = vpop.f32.mrb[0].mxu0
    %v317 = vadd.f32 0.0, %v316
    %v318 = vpop.f32.mrb[0].mxu0
    %319 = vmatprep.mubr.f32.mxu0 0.0
    %320 = vmatmul.mubr.f32.gmra.mrb[0].mxu0 %v174
    %v321 = vpop.f32.mrb[0].mxu0
    %v322 = vadd.f32 0.0, %v321
    %v323 = vpop.f32.mrb[0].mxu0
    %324 = vmatprep.mubr.f32.mxu0 0.0
    %325 = vmatmul.mubr.f32.gmra.mrb[0].mxu0 %v175
    %v326 = vpop.f32.mrb[0].mxu0
    %v327 = vadd.f32 0.0, %v326
    %v328 = vpop.f32.mrb[0].mxu0
    %329 = vmatprep.mubr.f32.mxu0 0.0
    %330 = vmatmul.mubr.f32.gmra.mrb[0].mxu0 %v176
    %v331 = vpop.f32.mrb[0].mxu0
    %v332 = vadd.f32 0.0, %v331
    %v333 = vpop.f32.mrb[0].mxu0
    %334 = vmatprep.mubr.f32.mxu0 0.0
    %335 = vmatmul.mubr.f32.gmra.mrb[0].mxu0 %v177
    %v336 = vpop.f32.mrb[0].mxu0
    %v337 = vadd.f32 0.0, %v336
    %v338 = vpop.f32.mrb[0].mxu0
    %339 = vmatprep.mubr.f32.mxu0 0.0
    %340 = vmatmul.mubr.f32.gmra.mrb[0].mxu0 %v178
    %v341 = vpop.f32.mrb[0].mxu0
    %v342 = vadd.f32 0.0, %v341
    %v343 = vpop.f32.mrb[0].mxu0
    %344 = vmatprep.mubr.f32.mxu0 0.0
    %345 = vmatmul.mubr.f32.gmra.mrb[0].mxu0 %v179
    %v346 = vpop.f32.mrb[0].mxu0
    %v347 = vadd.f32 0.0, %v346
    %v348 = vpop.f32.mrb[0].mxu0
    %349 = vmatprep.mubr.f32.mxu0 0.0
    %350 = vmatmul.mubr.f32.gmra.mrb[0].mxu0 %v180
    %v351 = vpop.f32.mrb[0].mxu0
    %v352 = vadd.f32 0.0, %v351
    %v353 = vpop.f32.mrb[0].mxu0
    %354 = vmatprep.mubr.f32.mxu0 0.0
    %355 = vmatmul.mubr.f32.gmra.mrb[0].mxu0 %v181
    %v356 = vpop.f32.mrb[0].mxu0
    %v357 = vadd.f32 0.0, %v356
    %v358 = vpop.f32.mrb[0].mxu0
    %359 = vdwg.mxu0
    %v360 = vpack.c.bf16 %v287, %v282
    %v361 = vpack.c.bf16 %v297, %v292
    %v362 = vpack.c.bf16 %v307, %v302
    %v363 = vpack.c.bf16 %v317, %v312
    %v364 = vpack.c.bf16 %v327, %v322
    %v365 = vpack.c.bf16 %v337, %v332
    %v366 = vpack.c.bf16 %v347, %v342
    %v367 = vpack.c.bf16 %v357, %v352
    %368 = vmatprep.subr.bf16.mxu0 0
    %369 = vmatpush1.bf16.msra.mxu0 %v360
    %370 = vmatprep.subr.bf16.mxu0 0
    %371 = vmatpush1.bf16.msra.mxu0 %v361
    %372 = vmatprep.subr.bf16.mxu0 0
    %373 = vmatpush1.bf16.msra.mxu0 %v362
    %374 = vmatprep.subr.bf16.mxu0 0
    %375 = vmatpush1.bf16.msra.mxu0 %v363
    %376 = vmatprep.subr.bf16.mxu0 0
    %377 = vmatpush1.bf16.msra.mxu0 %v364
    %378 = vmatprep.subr.bf16.mxu0 0
    %379 = vmatpush1.bf16.msra.mxu0 %v365
    %380 = vmatprep.subr.bf16.mxu0 0
    %381 = vmatpush1.bf16.msra.mxu0 %v366
    %382 = vmatprep.subr.bf16.mxu0 0
    %383 = vmatpush1.bf16.msra.mxu0 %v367
    %384 = vmatprep.subr.bf16.mxu0 0
    %385 = vmatpush1.bf16.msra.mxu0 0
    %386 = vmatprep.subr.bf16.mxu0 0
    %387 = vmatpush1.bf16.msra.mxu0 0
    %388 = vmatprep.subr.bf16.mxu0 0
    %389 = vmatpush1.bf16.msra.mxu0 0
    %390 = vmatprep.subr.bf16.mxu0 0
    %391 = vmatpush1.bf16.msra.mxu0 0
    %392 = vmatprep.subr.bf16.mxu0 0
    %393 = vmatpush1.bf16.msra.mxu0 0
    %394 = vmatprep.subr.bf16.mxu0 0
    %395 = vmatpush1.bf16.msra.mxu0 0
    %396 = vmatprep.subr.bf16.mxu0 0
    %397 = vmatpush1.bf16.msra.mxu0 0
    %398 = vmatprep.subr.bf16.mxu0 0
    %399 = vmatpush1.bf16.msra.mxu0 0
    %400 = vmatprep.mubr.bf16.mxu0 0
    %401 = vmatmul.mubr.bf16.gmra.mrb[0].mxu0 %v142
    %v402 = vpop.f32.mrb[0].mxu0
    %v403 = vadd.f32 0.0, %v402
    %v404 = vpop.f32.mrb[0].mxu0
    %v405 = vpop.f32.mrb[0].mxu0
    %v406 = vadd.f32 0.0, %v405
    %v407 = vpop.f32.mrb[0].mxu0
    %408 = vmatprep.mubr.bf16.mxu0 0
    %409 = vmatmul.mubr.bf16.gmra.mrb[0].mxu0 %v143
    %v410 = vpop.f32.mrb[0].mxu0
    %v411 = vadd.f32 0.0, %v410
    %v412 = vpop.f32.mrb[0].mxu0
    %v413 = vpop.f32.mrb[0].mxu0
    %v414 = vadd.f32 0.0, %v413
    %v415 = vpop.f32.mrb[0].mxu0
    %416 = vmatprep.mubr.bf16.mxu0 0
    %417 = vmatmul.mubr.bf16.gmra.mrb[0].mxu0 %v144
    %v418 = vpop.f32.mrb[0].mxu0
    %v419 = vadd.f32 0.0, %v418
    %v420 = vpop.f32.mrb[0].mxu0
    %v421 = vpop.f32.mrb[0].mxu0
    %v422 = vadd.f32 0.0, %v421
    %v423 = vpop.f32.mrb[0].mxu0
    %424 = vmatprep.mubr.bf16.mxu0 0
    %425 = vmatmul.mubr.bf16.gmra.mrb[0].mxu0 %v145
    %v426 = vpop.f32.mrb[0].mxu0
    %v427 = vadd.f32 0.0, %v426
    %v428 = vpop.f32.mrb[0].mxu0
    %v429 = vpop.f32.mrb[0].mxu0
    %v430 = vadd.f32 0.0, %v429
    %v431 = vpop.f32.mrb[0].mxu0
    %432 = vmatprep.mubr.bf16.mxu0 0
    %433 = vmatmul.mubr.bf16.gmra.mrb[0].mxu0 %v146
    %v434 = vpop.f32.mrb[0].mxu0
    %v435 = vadd.f32 0.0, %v434
    %v436 = vpop.f32.mrb[0].mxu0
    %v437 = vpop.f32.mrb[0].mxu0
    %v438 = vadd.f32 0.0, %v437
    %v439 = vpop.f32.mrb[0].mxu0
    %440 = vmatprep.mubr.bf16.mxu0 0
    %441 = vmatmul.mubr.bf16.gmra.mrb[0].mxu0 %v147
    %v442 = vpop.f32.mrb[0].mxu0
    %v443 = vadd.f32 0.0, %v442
    %v444 = vpop.f32.mrb[0].mxu0
    %v445 = vpop.f32.mrb[0].mxu0
    %v446 = vadd.f32 0.0, %v445
    %v447 = vpop.f32.mrb[0].mxu0
    %448 = vmatprep.mubr.bf16.mxu0 0
    %449 = vmatmul.mubr.bf16.gmra.mrb[0].mxu0 %v148
    %v450 = vpop.f32.mrb[0].mxu0
    %v451 = vadd.f32 0.0, %v450
    %v452 = vpop.f32.mrb[0].mxu0
    %v453 = vpop.f32.mrb[0].mxu0
    %v454 = vadd.f32 0.0, %v453
    %v455 = vpop.f32.mrb[0].mxu0
    %456 = vmatprep.mubr.bf16.mxu0 0
    %457 = vmatmul.mubr.bf16.gmra.mrb[0].mxu0 %v149
    %v458 = vpop.f32.mrb[0].mxu0
    %v459 = vadd.f32 0.0, %v458
    %v460 = vpop.f32.mrb[0].mxu0
    %v461 = vpop.f32.mrb[0].mxu0
    %v462 = vadd.f32 0.0, %v461
    %v463 = vpop.f32.mrb[0].mxu0
    %464 = vdwg.mxu0
    %466 = vset.pattern.permute.xlu0 0
    %467 = vperm.xlu0 %466, %v150
    %v468 = vpop.permute.xlu0 %467
    %471 = vset.pattern.permute.xlu0 0
    %472 = vperm.xlu0 %471, %v151
    %v473 = vpop.permute.xlu0 %472
    %476 = vset.pattern.permute.xlu0 0
    %477 = vperm.xlu0 %476, %v152
    %v478 = vpop.permute.xlu0 %477
    %481 = vset.pattern.permute.xlu0 0
    %482 = vperm.xlu0 %481, %v153
    %v483 = vpop.permute.xlu0 %482
    %486 = vset.pattern.permute.xlu0 0
    %487 = vperm.xlu0 %486, %v154
    %v488 = vpop.permute.xlu0 %487
    %491 = vset.pattern.permute.xlu0 0
    %492 = vperm.xlu0 %491, %v155
    %v493 = vpop.permute.xlu0 %492
    %496 = vset.pattern.permute.xlu0 0
    %497 = vperm.xlu0 %496, %v156
    %v498 = vpop.permute.xlu0 %497
    %501 = vset.pattern.permute.xlu0 0
    %502 = vperm.xlu0 %501, %v157
    %v503 = vpop.permute.xlu0 %502
    %506 = vset.pattern.permute.xlu0 0
    %507 = vperm.xlu0 %506, %v158
    %v508 = vpop.permute.xlu0 %507
    %511 = vset.pattern.permute.xlu0 0
    %512 = vperm.xlu0 %511, %v159
    %v513 = vpop.permute.xlu0 %512
    %516 = vset.pattern.permute.xlu0 0
    %517 = vperm.xlu0 %516, %v160
    %v518 = vpop.permute.xlu0 %517
    %521 = vset.pattern.permute.xlu0 0
    %522 = vperm.xlu0 %521, %v161
    %v523 = vpop.permute.xlu0 %522
    %526 = vset.pattern.permute.xlu0 0
    %527 = vperm.xlu0 %526, %v162
    %v528 = vpop.permute.xlu0 %527
    %531 = vset.pattern.permute.xlu0 0
    %532 = vperm.xlu0 %531, %v163
    %v533 = vpop.permute.xlu0 %532
    %536 = vset.pattern.permute.xlu0 0
    %537 = vperm.xlu0 %536, %v164
    %v538 = vpop.permute.xlu0 %537
    %541 = vset.pattern.permute.xlu0 0
    %542 = vperm.xlu0 %541, %v165
    %v543 = vpop.permute.xlu0 %542
    %v545 = vmul.f32 %v403, %v468
    %v546 = vmul.f32 %v406, %v473
    %v547 = vmul.f32 %v411, %v478
    %v548 = vmul.f32 %v414, %v483
    %v549 = vmul.f32 %v419, %v488
    %v550 = vmul.f32 %v422, %v493
    %v551 = vmul.f32 %v427, %v498
    %v552 = vmul.f32 %v430, %v503
    %v553 = vmul.f32 %v435, %v508
    %v554 = vmul.f32 %v438, %v513
    %v555 = vmul.f32 %v443, %v518
    %v556 = vmul.f32 %v446, %v523
    %v557 = vmul.f32 %v451, %v528
    %v558 = vmul.f32 %v454, %v533
    %v559 = vmul.f32 %v459, %v538
    %v560 = vmul.f32 %v462, %v543
    %561 = vmatprep.subr.mxu0 0.0
    %562 = vmatpush1.msra.mxu0 %v182
    %563 = vmatprep.subr.mxu0 0.0
    %564 = vmatpush1.msra.mxu0 %v183
    %565 = vmatprep.subr.mxu0 0.0
    %566 = vmatpush1.msra.mxu0 %v184
    %567 = vmatprep.subr.mxu0 0.0
    %568 = vmatpush1.msra.mxu0 %v185
    %569 = vmatprep.subr.mxu0 0.0
    %570 = vmatpush1.msra.mxu0 %v186
    %571 = vmatprep.subr.mxu0 0.0
    %572 = vmatpush1.msra.mxu0 %v187
    %573 = vmatprep.subr.mxu0 0.0
    %574 = vmatpush1.msra.mxu0 %v188
    %575 = vmatprep.subr.mxu0 0.0
    %576 = vmatpush1.msra.mxu0 %v189
    %577 = vmatprep.subr.mxu0 0.0
    %578 = vmatpush1.msra.mxu0 %v190
    %579 = vmatprep.subr.mxu0 0.0
    %580 = vmatpush1.msra.mxu0 %v191
    %581 = vmatprep.subr.mxu0 0.0
    %582 = vmatpush1.msra.mxu0 %v192
    %583 = vmatprep.subr.mxu0 0.0
    %584 = vmatpush1.msra.mxu0 %v193
    %585 = vmatprep.subr.mxu0 0.0
    %586 = vmatpush1.msra.mxu0 %v194
    %587 = vmatprep.subr.mxu0 0.0
    %588 = vmatpush1.msra.mxu0 %v195
    %589 = vmatprep.subr.mxu0 0.0
    %590 = vmatpush1.msra.mxu0 %v196
    %591 = vmatprep.subr.mxu0 0.0
    %592 = vmatpush1.msra.mxu0 %v197
    %593 = vmatprep.subr.mxu0 0.0
    %594 = vmatpush1.msra.mxu0 0.0
    %595 = vmatprep.subr.mxu0 0.0
    %596 = vmatpush1.msra.mxu0 0.0
    %597 = vmatprep.subr.mxu0 0.0
    %598 = vmatpush1.msra.mxu0 0.0
    %599 = vmatprep.subr.mxu0 0.0
    %600 = vmatpush1.msra.mxu0 0.0
    %601 = vmatprep.subr.mxu0 0.0
    %602 = vmatpush1.msra.mxu0 0.0
    %603 = vmatprep.subr.mxu0 0.0
    %604 = vmatpush1.msra.mxu0 0.0
    %605 = vmatprep.subr.mxu0 0.0
    %606 = vmatpush1.msra.mxu0 0.0
    %607 = vmatprep.subr.mxu0 0.0
    %608 = vmatpush1.msra.mxu0 0.0
    %609 = vmatprep.subr.mxu0 0.0
    %610 = vmatpush1.msra.mxu0 0.0
    %611 = vmatprep.subr.mxu0 0.0
    %612 = vmatpush1.msra.mxu0 0.0
    %613 = vmatprep.subr.mxu0 0.0
    %614 = vmatpush1.msra.mxu0 0.0
    %615 = vmatprep.subr.mxu0 0.0
    %616 = vmatpush1.msra.mxu0 0.0
    %617 = vmatprep.subr.mxu0 0.0
    %618 = vmatpush1.msra.mxu0 0.0
    %619 = vmatprep.subr.mxu0 0.0
    %620 = vmatpush1.msra.mxu0 0.0
    %621 = vmatprep.subr.mxu0 0.0
    %622 = vmatpush1.msra.mxu0 0.0
    %623 = vmatprep.subr.mxu0 0.0
    %624 = vmatpush1.msra.mxu0 0.0
    %625 = vmatprep.mubr.f32.mxu0 0.0
    %626 = vmatmul.mubr.f32.gmra.mrb[0].mxu0 %v166
    %v627 = vpop.f32.mrb[0].mxu0
    %v628 = vadd.f32 %v545, %v627
    %v629 = vpop.f32.mrb[0].mxu0
    %630 = vmatprep.mubr.f32.mxu0 0.0
    %631 = vmatmul.mubr.f32.gmra.mrb[0].mxu0 %v167
    %v632 = vpop.f32.mrb[0].mxu0
    %v633 = vadd.f32 %v546, %v632
    %v634 = vpop.f32.mrb[0].mxu0
    %635 = vmatprep.mubr.f32.mxu0 0.0
    %636 = vmatmul.mubr.f32.gmra.mrb[0].mxu0 %v168
    %v637 = vpop.f32.mrb[0].mxu0
    %v638 = vadd.f32 %v547, %v637
    %v639 = vpop.f32.mrb[0].mxu0
    %640 = vmatprep.mubr.f32.mxu0 0.0
    %641 = vmatmul.mubr.f32.gmra.mrb[0].mxu0 %v169
    %v642 = vpop.f32.mrb[0].mxu0
    %v643 = vadd.f32 %v548, %v642
    %v644 = vpop.f32.mrb[0].mxu0
    %645 = vmatprep.mubr.f32.mxu0 0.0
    %646 = vmatmul.mubr.f32.gmra.mrb[0].mxu0 %v170
    %v647 = vpop.f32.mrb[0].mxu0
    %v648 = vadd.f32 %v549, %v647
    %v649 = vpop.f32.mrb[0].mxu0
    %650 = vmatprep.mubr.f32.mxu0 0.0
    %651 = vmatmul.mubr.f32.gmra.mrb[0].mxu0 %v171
    %v652 = vpop.f32.mrb[0].mxu0
    %v653 = vadd.f32 %v550, %v652
    %v654 = vpop.f32.mrb[0].mxu0
    %655 = vmatprep.mubr.f32.mxu0 0.0
    %656 = vmatmul.mubr.f32.gmra.mrb[0].mxu0 %v172
    %v657 = vpop.f32.mrb[0].mxu0
    %v658 = vadd.f32 %v551, %v657
    %v659 = vpop.f32.mrb[0].mxu0
    %660 = vmatprep.mubr.f32.mxu0 0.0
    %661 = vmatmul.mubr.f32.gmra.mrb[0].mxu0 %v173
    %v662 = vpop.f32.mrb[0].mxu0
    %v663 = vadd.f32 %v552, %v662
    %v664 = vpop.f32.mrb[0].mxu0
    %665 = vmatprep.mubr.f32.mxu0 0.0
    %666 = vmatmul.mubr.f32.gmra.mrb[0].mxu0 %v174
    %v667 = vpop.f32.mrb[0].mxu0
    %v668 = vadd.f32 %v553, %v667
    %v669 = vpop.f32.mrb[0].mxu0
    %670 = vmatprep.mubr.f32.mxu0 0.0
    %671 = vmatmul.mubr.f32.gmra.mrb[0].mxu0 %v175
    %v672 = vpop.f32.mrb[0].mxu0
    %v673 = vadd.f32 %v554, %v672
    %v674 = vpop.f32.mrb[0].mxu0
    %675 = vmatprep.mubr.f32.mxu0 0.0
    %676 = vmatmul.mubr.f32.gmra.mrb[0].mxu0 %v176
    %v677 = vpop.f32.mrb[0].mxu0
    %v678 = vadd.f32 %v555, %v677
    %v679 = vpop.f32.mrb[0].mxu0
    %680 = vmatprep.mubr.f32.mxu0 0.0
    %681 = vmatmul.mubr.f32.gmra.mrb[0].mxu0 %v177
    %v682 = vpop.f32.mrb[0].mxu0
    %v683 = vadd.f32 %v556, %v682
    %v684 = vpop.f32.mrb[0].mxu0
    %685 = vmatprep.mubr.f32.mxu0 0.0
    %686 = vmatmul.mubr.f32.gmra.mrb[0].mxu0 %v178
    %v687 = vpop.f32.mrb[0].mxu0
    %v688 = vadd.f32 %v557, %v687
    %v689 = vpop.f32.mrb[0].mxu0
    %690 = vmatprep.mubr.f32.mxu0 0.0
    %691 = vmatmul.mubr.f32.gmra.mrb[0].mxu0 %v179
    %v692 = vpop.f32.mrb[0].mxu0
    %v693 = vadd.f32 %v558, %v692
    %v694 = vpop.f32.mrb[0].mxu0
    %695 = vmatprep.mubr.f32.mxu0 0.0
    %696 = vmatmul.mubr.f32.gmra.mrb[0].mxu0 %v180
    %v697 = vpop.f32.mrb[0].mxu0
    %v698 = vadd.f32 %v559, %v697
    %v699 = vpop.f32.mrb[0].mxu0
    %700 = vmatprep.mubr.f32.mxu0 0.0
    %701 = vmatmul.mubr.f32.gmra.mrb[0].mxu0 %v181
    %v702 = vpop.f32.mrb[0].mxu0
    %v703 = vadd.f32 %v560, %v702
    %v704 = vpop.f32.mrb[0].mxu0
    %705 = vdwg.mxu0
    %v707 = vlaneseq
    %v708 = vshrl.u32 %v707, 7
    %v709 = vsub.s32 0, %v708
    %v710 = vrot.slane %v214, %v709
    %v712 = vadd.f32 %v628, %v710
    %v713 = vadd.f32 %v633, %v710
    %v714 = vadd.f32 %v638, %v710
    %v715 = vadd.f32 %v643, %v710
    %v716 = vadd.f32 %v648, %v710
    %v717 = vadd.f32 %v653, %v710
    %v718 = vadd.f32 %v658, %v710
    %v719 = vadd.f32 %v663, %v710
    %v720 = vadd.f32 %v668, %v710
    %v721 = vadd.f32 %v673, %v710
    %v722 = vadd.f32 %v678, %v710
    %v723 = vadd.f32 %v683, %v710
    %v724 = vadd.f32 %v688, %v710
    %v725 = vadd.f32 %v693, %v710
    %v726 = vadd.f32 %v698, %v710
    %v727 = vadd.f32 %v703, %v710
    %v728 = vmax.f32 %v712, 0.0
    %v729 = vmax.f32 %v713, 0.0
    %v730 = vmax.f32 %v714, 0.0
    %v731 = vmax.f32 %v715, 0.0
    %v732 = vmax.f32 %v716, 0.0
    %v733 = vmax.f32 %v717, 0.0
    %v734 = vmax.f32 %v718, 0.0
    %v735 = vmax.f32 %v719, 0.0
    %v736 = vmax.f32 %v720, 0.0
    %v737 = vmax.f32 %v721, 0.0
    %v738 = vmax.f32 %v722, 0.0
    %v739 = vmax.f32 %v723, 0.0
    %v740 = vmax.f32 %v724, 0.0
    %v741 = vmax.f32 %v725, 0.0
    %v742 = vmax.f32 %v726, 0.0
    %v743 = vmax.f32 %v727, 0.0
    %v744 = vld [vmem:[#allocation8] sm:$0xff]
    %v745 = vld [vmem:[#allocation8 + $0x8] sm:$0xff]
    %v746 = vld [vmem:[#allocation8 + $0x10] sm:$0xff]
    %v747 = vld [vmem:[#allocation8 + $0x18] sm:$0xff]
    %v748 = vld [vmem:[#allocation8 + $0x20] sm:$0xff]
    %v749 = vld [vmem:[#allocation8 + $0x28] sm:$0xff]
    %v750 = vld [vmem:[#allocation8 + $0x30] sm:$0xff]
    %v751 = vld [vmem:[#allocation8 + $0x38] sm:$0xff]
    %v752 = vld [vmem:[#allocation8 + $0x40] sm:$0xff]
    %v753 = vld [vmem:[#allocation8 + $0x48] sm:$0xff]
    %v754 = vld [vmem:[#allocation8 + $0x50] sm:$0xff]
    %v755 = vld [vmem:[#allocation8 + $0x58] sm:$0xff]
    %v756 = vld [vmem:[#allocation8 + $0x60] sm:$0xff]
    %v757 = vld [vmem:[#allocation8 + $0x68] sm:$0xff]
    %v758 = vld [vmem:[#allocation8 + $0x70] sm:$0xff]
    %v759 = vld [vmem:[#allocation8 + $0x78] sm:$0xff]
    %v760 = vld [vmem:[#allocation10] sm:$0xff]
    %v761 = vld [vmem:[#allocation10 + $0x8] sm:$0xff]
    %v762 = vld [vmem:[#allocation10 + $0x10] sm:$0xff]
    %v763 = vld [vmem:[#allocation10 + $0x18] sm:$0xff]
    %v764 = vld [vmem:[#allocation10 + $0x20] sm:$0xff]
    %v765 = vld [vmem:[#allocation10 + $0x28] sm:$0xff]
    %v766 = vld [vmem:[#allocation10 + $0x30] sm:$0xff]
    %v767 = vld [vmem:[#allocation10 + $0x38] sm:$0xff]
    %v768 = vld [vmem:[#allocation10 + $0x40] sm:$0xff]
    %v769 = vld [vmem:[#allocation10 + $0x48] sm:$0xff]
    %v770 = vld [vmem:[#allocation10 + $0x50] sm:$0xff]
    %v771 = vld [vmem:[#allocation10 + $0x58] sm:$0xff]
    %v772 = vld [vmem:[#allocation10 + $0x60] sm:$0xff]
    %v773 = vld [vmem:[#allocation10 + $0x68] sm:$0xff]
    %v774 = vld [vmem:[#allocation10 + $0x70] sm:$0xff]
    %v775 = vld [vmem:[#allocation10 + $0x78] sm:$0xff]
    %v776 = vld [vmem:[%s8] sm:$0x1]
    %777 = vmatprep.subr.mxu0 0.0
    %778 = vmatpush1.msra.mxu0 %v760
    %779 = vmatprep.subr.mxu0 0.0
    %780 = vmatpush1.msra.mxu0 %v761
    %781 = vmatprep.subr.mxu0 0.0
    %782 = vmatpush1.msra.mxu0 %v762
    %783 = vmatprep.subr.mxu0 0.0
    %784 = vmatpush1.msra.mxu0 %v763
    %785 = vmatprep.subr.mxu0 0.0
    %786 = vmatpush1.msra.mxu0 %v764
    %787 = vmatprep.subr.mxu0 0.0
    %788 = vmatpush1.msra.mxu0 %v765
    %789 = vmatprep.subr.mxu0 0.0
    %790 = vmatpush1.msra.mxu0 %v766
    %791 = vmatprep.subr.mxu0 0.0
    %792 = vmatpush1.msra.mxu0 %v767
    %793 = vmatprep.subr.mxu0 0.0
    %794 = vmatpush1.msra.mxu0 %v768
    %795 = vmatprep.subr.mxu0 0.0
    %796 = vmatpush1.msra.mxu0 %v769
    %797 = vmatprep.subr.mxu0 0.0
    %798 = vmatpush1.msra.mxu0 %v770
    %799 = vmatprep.subr.mxu0 0.0
    %800 = vmatpush1.msra.mxu0 %v771
    %801 = vmatprep.subr.mxu0 0.0
    %802 = vmatpush1.msra.mxu0 %v772
    %803 = vmatprep.subr.mxu0 0.0
    %804 = vmatpush1.msra.mxu0 %v773
    %805 = vmatprep.subr.mxu0 0.0
    %806 = vmatpush1.msra.mxu0 %v774
    %807 = vmatprep.subr.mxu0 0.0
    %808 = vmatpush1.msra.mxu0 %v775
    %809 = vmatprep.subr.mxu0 0.0
    %810 = vmatpush1.msra.mxu0 0.0
    %811 = vmatprep.subr.mxu0 0.0
    %812 = vmatpush1.msra.mxu0 0.0
    %813 = vmatprep.subr.mxu0 0.0
    %814 = vmatpush1.msra.mxu0 0.0
    %815 = vmatprep.subr.mxu0 0.0
    %816 = vmatpush1.msra.mxu0 0.0
    %817 = vmatprep.subr.mxu0 0.0
    %818 = vmatpush1.msra.mxu0 0.0
    %819 = vmatprep.subr.mxu0 0.0
    %820 = vmatpush1.msra.mxu0 0.0
    %821 = vmatprep.subr.mxu0 0.0
    %822 = vmatpush1.msra.mxu0 0.0
    %823 = vmatprep.subr.mxu0 0.0
    %824 = vmatpush1.msra.mxu0 0.0
    %825 = vmatprep.subr.mxu0 0.0
    %826 = vmatpush1.msra.mxu0 0.0
    %827 = vmatprep.subr.mxu0 0.0
    %828 = vmatpush1.msra.mxu0 0.0
    %829 = vmatprep.subr.mxu0 0.0
    %830 = vmatpush1.msra.mxu0 0.0
    %831 = vmatprep.subr.mxu0 0.0
    %832 = vmatpush1.msra.mxu0 0.0
    %833 = vmatprep.subr.mxu0 0.0
    %834 = vmatpush1.msra.mxu0 0.0
    %835 = vmatprep.subr.mxu0 0.0
    %836 = vmatpush1.msra.mxu0 0.0
    %837 = vmatprep.subr.mxu0 0.0
    %838 = vmatpush1.msra.mxu0 0.0
    %839 = vmatprep.subr.mxu0 0.0
    %840 = vmatpush1.msra.mxu0 0.0
    %841 = vmatprep.mubr.f32.mxu0 0.0
    %842 = vmatmul.mubr.f32.gmra.mrb[0].mxu0 %v728
    %v843 = vpop.f32.mrb[0].mxu0
    %v844 = vadd.f32 0.0, %v843
    %v845 = vpop.f32.mrb[0].mxu0
    %846 = vmatprep.mubr.f32.mxu0 0.0
    %847 = vmatmul.mubr.f32.gmra.mrb[0].mxu0 %v729
    %v848 = vpop.f32.mrb[0].mxu0
    %v849 = vadd.f32 0.0, %v848
    %v850 = vpop.f32.mrb[0].mxu0
    %851 = vmatprep.mubr.f32.mxu0 0.0
    %852 = vmatmul.mubr.f32.gmra.mrb[0].mxu0 %v730
    %v853 = vpop.f32.mrb[0].mxu0
    %v854 = vadd.f32 0.0, %v853
    %v855 = vpop.f32.mrb[0].mxu0
    %856 = vmatprep.mubr.f32.mxu0 0.0
    %857 = vmatmul.mubr.f32.gmra.mrb[0].mxu0 %v731
    %v858 = vpop.f32.mrb[0].mxu0
    %v859 = vadd.f32 0.0, %v858
    %v860 = vpop.f32.mrb[0].mxu0
    %861 = vmatprep.mubr.f32.mxu0 0.0
    %862 = vmatmul.mubr.f32.gmra.mrb[0].mxu0 %v732
    %v863 = vpop.f32.mrb[0].mxu0
    %v864 = vadd.f32 0.0, %v863
    %v865 = vpop.f32.mrb[0].mxu0
    %866 = vmatprep.mubr.f32.mxu0 0.0
    %867 = vmatmul.mubr.f32.gmra.mrb[0].mxu0 %v733
    %v868 = vpop.f32.mrb[0].mxu0
    %v869 = vadd.f32 0.0, %v868
    %v870 = vpop.f32.mrb[0].mxu0
    %871 = vmatprep.mubr.f32.mxu0 0.0
    %872 = vmatmul.mubr.f32.gmra.mrb[0].mxu0 %v734
    %v873 = vpop.f32.mrb[0].mxu0
    %v874 = vadd.f32 0.0, %v873
    %v875 = vpop.f32.mrb[0].mxu0
    %876 = vmatprep.mubr.f32.mxu0 0.0
    %877 = vmatmul.mubr.f32.gmra.mrb[0].mxu0 %v735
    %v878 = vpop.f32.mrb[0].mxu0
    %v879 = vadd.f32 0.0, %v878
    %v880 = vpop.f32.mrb[0].mxu0
    %881 = vmatprep.mubr.f32.mxu0 0.0
    %882 = vmatmul.mubr.f32.gmra.mrb[0].mxu0 %v736
    %v883 = vpop.f32.mrb[0].mxu0
    %v884 = vadd.f32 0.0, %v883
    %v885 = vpop.f32.mrb[0].mxu0
    %886 = vmatprep.mubr.f32.mxu0 0.0
    %887 = vmatmul.mubr.f32.gmra.mrb[0].mxu0 %v737
    %v888 = vpop.f32.mrb[0].mxu0
    %v889 = vadd.f32 0.0, %v888
    %v890 = vpop.f32.mrb[0].mxu0
    %891 = vmatprep.mubr.f32.mxu0 0.0
    %892 = vmatmul.mubr.f32.gmra.mrb[0].mxu0 %v738
    %v893 = vpop.f32.mrb[0].mxu0
    %v894 = vadd.f32 0.0, %v893
    %v895 = vpop.f32.mrb[0].mxu0
    %896 = vmatprep.mubr.f32.mxu0 0.0
    %897 = vmatmul.mubr.f32.gmra.mrb[0].mxu0 %v739
    %v898 = vpop.f32.mrb[0].mxu0
    %v899 = vadd.f32 0.0, %v898
    %v900 = vpop.f32.mrb[0].mxu0
    %901 = vmatprep.mubr.f32.mxu0 0.0
    %902 = vmatmul.mubr.f32.gmra.mrb[0].mxu0 %v740
    %v903 = vpop.f32.mrb[0].mxu0
    %v904 = vadd.f32 0.0, %v903
    %v905 = vpop.f32.mrb[0].mxu0
    %906 = vmatprep.mubr.f32.mxu0 0.0
    %907 = vmatmul.mubr.f32.gmra.mrb[0].mxu0 %v741
    %v908 = vpop.f32.mrb[0].mxu0
    %v909 = vadd.f32 0.0, %v908
    %v910 = vpop.f32.mrb[0].mxu0
    %911 = vmatprep.mubr.f32.mxu0 0.0
    %912 = vmatmul.mubr.f32.gmra.mrb[0].mxu0 %v742
    %v913 = vpop.f32.mrb[0].mxu0
    %v914 = vadd.f32 0.0, %v913
    %v915 = vpop.f32.mrb[0].mxu0
    %916 = vmatprep.mubr.f32.mxu0 0.0
    %917 = vmatmul.mubr.f32.gmra.mrb[0].mxu0 %v743
    %v918 = vpop.f32.mrb[0].mxu0
    %v919 = vadd.f32 0.0, %v918
    %v920 = vpop.f32.mrb[0].mxu0
    %921 = vdwg.mxu0
    %v922 = vpack.c.bf16 %v849, %v844
    %v923 = vpack.c.bf16 %v859, %v854
    %v924 = vpack.c.bf16 %v869, %v864
    %v925 = vpack.c.bf16 %v879, %v874
    %v926 = vpack.c.bf16 %v889, %v884
    %v927 = vpack.c.bf16 %v899, %v894
    %v928 = vpack.c.bf16 %v909, %v904
    %v929 = vpack.c.bf16 %v919, %v914
    %930 = vmatprep.subr.bf16.mxu0 0
    %931 = vmatpush1.bf16.msra.mxu0 %v922
    %932 = vmatprep.subr.bf16.mxu0 0
    %933 = vmatpush1.bf16.msra.mxu0 %v923
    %934 = vmatprep.subr.bf16.mxu0 0
    %935 = vmatpush1.bf16.msra.mxu0 %v924
    %936 = vmatprep.subr.bf16.mxu0 0
    %937 = vmatpush1.bf16.msra.mxu0 %v925
    %938 = vmatprep.subr.bf16.mxu0 0
    %939 = vmatpush1.bf16.msra.mxu0 %v926
    %940 = vmatprep.subr.bf16.mxu0 0
    %941 = vmatpush1.bf16.msra.mxu0 %v927
    %942 = vmatprep.subr.bf16.mxu0 0
    %943 = vmatpush1.bf16.msra.mxu0 %v928
    %944 = vmatprep.subr.bf16.mxu0 0
    %945 = vmatpush1.bf16.msra.mxu0 %v929
    %946 = vmatprep.subr.bf16.mxu0 0
    %947 = vmatpush1.bf16.msra.mxu0 0
    %948 = vmatprep.subr.bf16.mxu0 0
    %949 = vmatpush1.bf16.msra.mxu0 0
    %950 = vmatprep.subr.bf16.mxu0 0
    %951 = vmatpush1.bf16.msra.mxu0 0
    %952 = vmatprep.subr.bf16.mxu0 0
    %953 = vmatpush1.bf16.msra.mxu0 0
    %954 = vmatprep.subr.bf16.mxu0 0
    %955 = vmatpush1.bf16.msra.mxu0 0
    %956 = vmatprep.subr.bf16.mxu0 0
    %957 = vmatpush1.bf16.msra.mxu0 0
    %958 = vmatprep.subr.bf16.mxu0 0
    %959 = vmatpush1.bf16.msra.mxu0 0
    %960 = vmatprep.subr.bf16.mxu0 0
    %961 = vmatpush1.bf16.msra.mxu0 0
    %962 = vmatprep.mubr.bf16.mxu0 0
    %963 = vmatmul.mubr.bf16.gmra.mrb[0].mxu0 %v142
    %v964 = vpop.f32.mrb[0].mxu0
    %v965 = vadd.f32 0.0, %v964
    %v966 = vpop.f32.mrb[0].mxu0
    %v967 = vpop.f32.mrb[0].mxu0
    %v968 = vadd.f32 0.0, %v967
    %v969 = vpop.f32.mrb[0].mxu0
    %970 = vmatprep.mubr.bf16.mxu0 0
    %971 = vmatmul.mubr.bf16.gmra.mrb[0].mxu0 %v143
    %v972 = vpop.f32.mrb[0].mxu0
    %v973 = vadd.f32 0.0, %v972
    %v974 = vpop.f32.mrb[0].mxu0
    %v975 = vpop.f32.mrb[0].mxu0
    %v976 = vadd.f32 0.0, %v975
    %v977 = vpop.f32.mrb[0].mxu0
    %978 = vmatprep.mubr.bf16.mxu0 0
    %979 = vmatmul.mubr.bf16.gmra.mrb[0].mxu0 %v144
    %v980 = vpop.f32.mrb[0].mxu0
    %v981 = vadd.f32 0.0, %v980
    %v982 = vpop.f32.mrb[0].mxu0
    %v983 = vpop.f32.mrb[0].mxu0
    %v984 = vadd.f32 0.0, %v983
    %v985 = vpop.f32.mrb[0].mxu0
    %986 = vmatprep.mubr.bf16.mxu0 0
    %987 = vmatmul.mubr.bf16.gmra.mrb[0].mxu0 %v145
    %v988 = vpop.f32.mrb[0].mxu0
    %v989 = vadd.f32 0.0, %v988
    %v990 = vpop.f32.mrb[0].mxu0
    %v991 = vpop.f32.mrb[0].mxu0
    %v992 = vadd.f32 0.0, %v991
    %v993 = vpop.f32.mrb[0].mxu0
    %994 = vmatprep.mubr.bf16.mxu0 0
    %995 = vmatmul.mubr.bf16.gmra.mrb[0].mxu0 %v146
    %v996 = vpop.f32.mrb[0].mxu0
    %v997 = vadd.f32 0.0, %v996
    %v998 = vpop.f32.mrb[0].mxu0
    %v999 = vpop.f32.mrb[0].mxu0
    %v1000 = vadd.f32 0.0, %v999
    %v1001 = vpop.f32.mrb[0].mxu0
    %1002 = vmatprep.mubr.bf16.mxu0 0
    %1003 = vmatmul.mubr.bf16.gmra.mrb[0].mxu0 %v147
    %v1004 = vpop.f32.mrb[0].mxu0
    %v1005 = vadd.f32 0.0, %v1004
    %v1006 = vpop.f32.mrb[0].mxu0
    %v1007 = vpop.f32.mrb[0].mxu0
    %v1008 = vadd.f32 0.0, %v1007
    %v1009 = vpop.f32.mrb[0].mxu0
    %1010 = vmatprep.mubr.bf16.mxu0 0
    %1011 = vmatmul.mubr.bf16.gmra.mrb[0].mxu0 %v148
    %v1012 = vpop.f32.mrb[0].mxu0
    %v1013 = vadd.f32 0.0, %v1012
    %v1014 = vpop.f32.mrb[0].mxu0
    %v1015 = vpop.f32.mrb[0].mxu0
    %v1016 = vadd.f32 0.0, %v1015
    %v1017 = vpop.f32.mrb[0].mxu0
    %1018 = vmatprep.mubr.bf16.mxu0 0
    %1019 = vmatmul.mubr.bf16.gmra.mrb[0].mxu0 %v149
    %v1020 = vpop.f32.mrb[0].mxu0
    %v1021 = vadd.f32 0.0, %v1020
    %v1022 = vpop.f32.mrb[0].mxu0
    %v1023 = vpop.f32.mrb[0].mxu0
    %v1024 = vadd.f32 0.0, %v1023
    %v1025 = vpop.f32.mrb[0].mxu0
    %1026 = vdwg.mxu0
    %v1027 = vmul.f32 %v965, %v468
    %v1028 = vmul.f32 %v968, %v473
    %v1029 = vmul.f32 %v973, %v478
    %v1030 = vmul.f32 %v976, %v483
    %v1031 = vmul.f32 %v981, %v488
    %v1032 = vmul.f32 %v984, %v493
    %v1033 = vmul.f32 %v989, %v498
    %v1034 = vmul.f32 %v992, %v503
    %v1035 = vmul.f32 %v997, %v508
    %v1036 = vmul.f32 %v1000, %v513
    %v1037 = vmul.f32 %v1005, %v518
    %v1038 = vmul.f32 %v1008, %v523
    %v1039 = vmul.f32 %v1013, %v528
    %v1040 = vmul.f32 %v1016, %v533
    %v1041 = vmul.f32 %v1021, %v538
    %v1042 = vmul.f32 %v1024, %v543
    %1043 = vmatprep.subr.mxu0 0.0
    %1044 = vmatpush1.msra.mxu0 %v744
    %1045 = vmatprep.subr.mxu0 0.0
    %1046 = vmatpush1.msra.mxu0 %v745
    %1047 = vmatprep.subr.mxu0 0.0
    %1048 = vmatpush1.msra.mxu0 %v746
    %1049 = vmatprep.subr.mxu0 0.0
    %1050 = vmatpush1.msra.mxu0 %v747
    %1051 = vmatprep.subr.mxu0 0.0
    %1052 = vmatpush1.msra.mxu0 %v748
    %1053 = vmatprep.subr.mxu0 0.0
    %1054 = vmatpush1.msra.mxu0 %v749
    %1055 = vmatprep.subr.mxu0 0.0
    %1056 = vmatpush1.msra.mxu0 %v750
    %1057 = vmatprep.subr.mxu0 0.0
    %1058 = vmatpush1.msra.mxu0 %v751
    %1059 = vmatprep.subr.mxu0 0.0
    %1060 = vmatpush1.msra.mxu0 %v752
    %1061 = vmatprep.subr.mxu0 0.0
    %1062 = vmatpush1.msra.mxu0 %v753
    %1063 = vmatprep.subr.mxu0 0.0
    %1064 = vmatpush1.msra.mxu0 %v754
    %1065 = vmatprep.subr.mxu0 0.0
    %1066 = vmatpush1.msra.mxu0 %v755
    %1067 = vmatprep.subr.mxu0 0.0
    %1068 = vmatpush1.msra.mxu0 %v756
    %1069 = vmatprep.subr.mxu0 0.0
    %1070 = vmatpush1.msra.mxu0 %v757
    %1071 = vmatprep.subr.mxu0 0.0
    %1072 = vmatpush1.msra.mxu0 %v758
    %1073 = vmatprep.subr.mxu0 0.0
    %1074 = vmatpush1.msra.mxu0 %v759
    %1075 = vmatprep.subr.mxu0 0.0
    %1076 = vmatpush1.msra.mxu0 0.0
    %1077 = vmatprep.subr.mxu0 0.0
    %1078 = vmatpush1.msra.mxu0 0.0
    %1079 = vmatprep.subr.mxu0 0.0
    %1080 = vmatpush1.msra.mxu0 0.0
    %1081 = vmatprep.subr.mxu0 0.0
    %1082 = vmatpush1.msra.mxu0 0.0
    %1083 = vmatprep.subr.mxu0 0.0
    %1084 = vmatpush1.msra.mxu0 0.0
    %1085 = vmatprep.subr.mxu0 0.0
    %1086 = vmatpush1.msra.mxu0 0.0
    %1087 = vmatprep.subr.mxu0 0.0
    %1088 = vmatpush1.msra.mxu0 0.0
    %1089 = vmatprep.subr.mxu0 0.0
    %1090 = vmatpush1.msra.mxu0 0.0
    %1091 = vmatprep.subr.mxu0 0.0
    %1092 = vmatpush1.msra.mxu0 0.0
    %1093 = vmatprep.subr.mxu0 0.0
    %1094 = vmatpush1.msra.mxu0 0.0
    %1095 = vmatprep.subr.mxu0 0.0
    %1096 = vmatpush1.msra.mxu0 0.0
    %1097 = vmatprep.subr.mxu0 0.0
    %1098 = vmatpush1.msra.mxu0 0.0
    %1099 = vmatprep.subr.mxu0 0.0
    %1100 = vmatpush1.msra.mxu0 0.0
    %1101 = vmatprep.subr.mxu0 0.0
    %1102 = vmatpush1.msra.mxu0 0.0
    %1103 = vmatprep.subr.mxu0 0.0
    %1104 = vmatpush1.msra.mxu0 0.0
    %1105 = vmatprep.subr.mxu0 0.0
    %1106 = vmatpush1.msra.mxu0 0.0
    %1107 = vmatprep.mubr.f32.mxu0 0.0
    %1108 = vmatmul.mubr.f32.gmra.mrb[0].mxu0 %v728
    %v1109 = vpop.f32.mrb[0].mxu0
    %v1110 = vadd.f32 %v1027, %v1109
    %v1111 = vpop.f32.mrb[0].mxu0
    %1112 = vmatprep.mubr.f32.mxu0 0.0
    %1113 = vmatmul.mubr.f32.gmra.mrb[0].mxu0 %v729
    %v1114 = vpop.f32.mrb[0].mxu0
    %v1115 = vadd.f32 %v1028, %v1114
    %v1116 = vpop.f32.mrb[0].mxu0
    %1117 = vmatprep.mubr.f32.mxu0 0.0
    %1118 = vmatmul.mubr.f32.gmra.mrb[0].mxu0 %v730
    %v1119 = vpop.f32.mrb[0].mxu0
    %v1120 = vadd.f32 %v1029, %v1119
    %v1121 = vpop.f32.mrb[0].mxu0
    %1122 = vmatprep.mubr.f32.mxu0 0.0
    %1123 = vmatmul.mubr.f32.gmra.mrb[0].mxu0 %v731
    %v1124 = vpop.f32.mrb[0].mxu0
    %v1125 = vadd.f32 %v1030, %v1124
    %v1126 = vpop.f32.mrb[0].mxu0
    %1127 = vmatprep.mubr.f32.mxu0 0.0
    %1128 = vmatmul.mubr.f32.gmra.mrb[0].mxu0 %v732
    %v1129 = vpop.f32.mrb[0].mxu0
    %v1130 = vadd.f32 %v1031, %v1129
    %v1131 = vpop.f32.mrb[0].mxu0
    %1132 = vmatprep.mubr.f32.mxu0 0.0
    %1133 = vmatmul.mubr.f32.gmra.mrb[0].mxu0 %v733
    %v1134 = vpop.f32.mrb[0].mxu0
    %v1135 = vadd.f32 %v1032, %v1134
    %v1136 = vpop.f32.mrb[0].mxu0
    %1137 = vmatprep.mubr.f32.mxu0 0.0
    %1138 = vmatmul.mubr.f32.gmra.mrb[0].mxu0 %v734
    %v1139 = vpop.f32.mrb[0].mxu0
    %v1140 = vadd.f32 %v1033, %v1139
    %v1141 = vpop.f32.mrb[0].mxu0
    %1142 = vmatprep.mubr.f32.mxu0 0.0
    %1143 = vmatmul.mubr.f32.gmra.mrb[0].mxu0 %v735
    %v1144 = vpop.f32.mrb[0].mxu0
    %v1145 = vadd.f32 %v1034, %v1144
    %v1146 = vpop.f32.mrb[0].mxu0
    %1147 = vmatprep.mubr.f32.mxu0 0.0
    %1148 = vmatmul.mubr.f32.gmra.mrb[0].mxu0 %v736
    %v1149 = vpop.f32.mrb[0].mxu0
    %v1150 = vadd.f32 %v1035, %v1149
    %v1151 = vpop.f32.mrb[0].mxu0
    %1152 = vmatprep.mubr.f32.mxu0 0.0
    %1153 = vmatmul.mubr.f32.gmra.mrb[0].mxu0 %v737
    %v1154 = vpop.f32.mrb[0].mxu0
    %v1155 = vadd.f32 %v1036, %v1154
    %v1156 = vpop.f32.mrb[0].mxu0
    %1157 = vmatprep.mubr.f32.mxu0 0.0
    %1158 = vmatmul.mubr.f32.gmra.mrb[0].mxu0 %v738
    %v1159 = vpop.f32.mrb[0].mxu0
    %v1160 = vadd.f32 %v1037, %v1159
    %v1161 = vpop.f32.mrb[0].mxu0
    %1162 = vmatprep.mubr.f32.mxu0 0.0
    %1163 = vmatmul.mubr.f32.gmra.mrb[0].mxu0 %v739
    %v1164 = vpop.f32.mrb[0].mxu0
    %v1165 = vadd.f32 %v1038, %v1164
    %v1166 = vpop.f32.mrb[0].mxu0
    %1167 = vmatprep.mubr.f32.mxu0 0.0
    %1168 = vmatmul.mubr.f32.gmra.mrb[0].mxu0 %v740
    %v1169 = vpop.f32.mrb[0].mxu0
    %v1170 = vadd.f32 %v1039, %v1169
    %v1171 = vpop.f32.mrb[0].mxu0
    %1172 = vmatprep.mubr.f32.mxu0 0.0
    %1173 = vmatmul.mubr.f32.gmra.mrb[0].mxu0 %v741
    %v1174 = vpop.f32.mrb[0].mxu0
    %v1175 = vadd.f32 %v1040, %v1174
    %v1176 = vpop.f32.mrb[0].mxu0
    %1177 = vmatprep.mubr.f32.mxu0 0.0
    %1178 = vmatmul.mubr.f32.gmra.mrb[0].mxu0 %v742
    %v1179 = vpop.f32.mrb[0].mxu0
    %v1180 = vadd.f32 %v1041, %v1179
    %v1181 = vpop.f32.mrb[0].mxu0
    %1182 = vmatprep.mubr.f32.mxu0 0.0
    %1183 = vmatmul.mubr.f32.gmra.mrb[0].mxu0 %v743
    %v1184 = vpop.f32.mrb[0].mxu0
    %v1185 = vadd.f32 %v1042, %v1184
    %v1186 = vpop.f32.mrb[0].mxu0
    %1187 = vdwg.mxu0
    %v1189 = vlaneseq
    %v1190 = vshrl.u32 %v1189, 7
    %v1191 = vsub.s32 0, %v1190
    %v1192 = vrot.slane %v776, %v1191
    %v1194 = vadd.f32 %v1110, %v1192
    %v1195 = vadd.f32 %v1115, %v1192
    %v1196 = vadd.f32 %v1120, %v1192
    %v1197 = vadd.f32 %v1125, %v1192
    %v1198 = vadd.f32 %v1130, %v1192
    %v1199 = vadd.f32 %v1135, %v1192
    %v1200 = vadd.f32 %v1140, %v1192
    %v1201 = vadd.f32 %v1145, %v1192
    %v1202 = vadd.f32 %v1150, %v1192
    %v1203 = vadd.f32 %v1155, %v1192
    %v1204 = vadd.f32 %v1160, %v1192
    %v1205 = vadd.f32 %v1165, %v1192
    %v1206 = vadd.f32 %v1170, %v1192
    %v1207 = vadd.f32 %v1175, %v1192
    %v1208 = vadd.f32 %v1180, %v1192
    %v1209 = vadd.f32 %v1185, %v1192
    %v1210 = vmax.f32 %v1194, 0.0
    %v1211 = vmax.f32 %v1195, 0.0
    %v1212 = vmax.f32 %v1196, 0.0
    %v1213 = vmax.f32 %v1197, 0.0
    %v1214 = vmax.f32 %v1198, 0.0
    %v1215 = vmax.f32 %v1199, 0.0
    %v1216 = vmax.f32 %v1200, 0.0
    %v1217 = vmax.f32 %v1201, 0.0
    %v1218 = vmax.f32 %v1202, 0.0
    %v1219 = vmax.f32 %v1203, 0.0
    %v1220 = vmax.f32 %v1204, 0.0
    %v1221 = vmax.f32 %v1205, 0.0
    %v1222 = vmax.f32 %v1206, 0.0
    %v1223 = vmax.f32 %v1207, 0.0
    %v1224 = vmax.f32 %v1208, 0.0
    %v1225 = vmax.f32 %v1209, 0.0
    %v1226 = vld [vmem:[#allocation11] sm:$0xff]
    %v1227 = vld [vmem:[#allocation11 + $0x8] sm:$0xff]
    %v1228 = vld [vmem:[#allocation11 + $0x10] sm:$0xff]
    %v1229 = vld [vmem:[#allocation11 + $0x18] sm:$0xff]
    %v1230 = vld [vmem:[#allocation11 + $0x20] sm:$0xff]
    %v1231 = vld [vmem:[#allocation11 + $0x28] sm:$0xff]
    %v1232 = vld [vmem:[#allocation11 + $0x30] sm:$0xff]
    %v1233 = vld [vmem:[#allocation11 + $0x38] sm:$0xff]
    %v1234 = vld [vmem:[#allocation11 + $0x40] sm:$0xff]
    %v1235 = vld [vmem:[#allocation11 + $0x48] sm:$0xff]
    %v1236 = vld [vmem:[#allocation11 + $0x50] sm:$0xff]
    %v1237 = vld [vmem:[#allocation11 + $0x58] sm:$0xff]
    %v1238 = vld [vmem:[#allocation11 + $0x60] sm:$0xff]
    %v1239 = vld [vmem:[#allocation11 + $0x68] sm:$0xff]
    %v1240 = vld [vmem:[#allocation11 + $0x70] sm:$0xff]
    %v1241 = vld [vmem:[#allocation11 + $0x78] sm:$0xff]
    %v1242 = vld [vmem:[#allocation13] sm:$0xff]
    %v1243 = vld [vmem:[#allocation13 + $0x8] sm:$0xff]
    %v1244 = vld [vmem:[#allocation13 + $0x10] sm:$0xff]
    %v1245 = vld [vmem:[#allocation13 + $0x18] sm:$0xff]
    %v1246 = vld [vmem:[#allocation13 + $0x20] sm:$0xff]
    %v1247 = vld [vmem:[#allocation13 + $0x28] sm:$0xff]
    %v1248 = vld [vmem:[#allocation13 + $0x30] sm:$0xff]
    %v1249 = vld [vmem:[#allocation13 + $0x38] sm:$0xff]
    %v1250 = vld [vmem:[#allocation13 + $0x40] sm:$0xff]
    %v1251 = vld [vmem:[#allocation13 + $0x48] sm:$0xff]
    %v1252 = vld [vmem:[#allocation13 + $0x50] sm:$0xff]
    %v1253 = vld [vmem:[#allocation13 + $0x58] sm:$0xff]
    %v1254 = vld [vmem:[#allocation13 + $0x60] sm:$0xff]
    %v1255 = vld [vmem:[#allocation13 + $0x68] sm:$0xff]
    %v1256 = vld [vmem:[#allocation13 + $0x70] sm:$0xff]
    %v1257 = vld [vmem:[#allocation13 + $0x78] sm:$0xff]
    %v1258 = vld [vmem:[%s11] sm:$0x1]
    %1259 = vmatprep.subr.mxu0 0.0
    %1260 = vmatpush1.msra.mxu0 %v1242
    %1261 = vmatprep.subr.mxu0 0.0
    %1262 = vmatpush1.msra.mxu0 %v1243
    %1263 = vmatprep.subr.mxu0 0.0
    %1264 = vmatpush1.msra.mxu0 %v1244
    %1265 = vmatprep.subr.mxu0 0.0
    %1266 = vmatpush1.msra.mxu0 %v1245
    %1267 = vmatprep.subr.mxu0 0.0
    %1268 = vmatpush1.msra.mxu0 %v1246
    %1269 = vmatprep.subr.mxu0 0.0
    %1270 = vmatpush1.msra.mxu0 %v1247
    %1271 = vmatprep.subr.mxu0 0.0
    %1272 = vmatpush1.msra.mxu0 %v1248
    %1273 = vmatprep.subr.mxu0 0.0
    %1274 = vmatpush1.msra.mxu0 %v1249
    %1275 = vmatprep.subr.mxu0 0.0
    %1276 = vmatpush1.msra.mxu0 %v1250
    %1277 = vmatprep.subr.mxu0 0.0
    %1278 = vmatpush1.msra.mxu0 %v1251
    %1279 = vmatprep.subr.mxu0 0.0
    %1280 = vmatpush1.msra.mxu0 %v1252
    %1281 = vmatprep.subr.mxu0 0.0
    %1282 = vmatpush1.msra.mxu0 %v1253
    %1283 = vmatprep.subr.mxu0 0.0
    %1284 = vmatpush1.msra.mxu0 %v1254
    %1285 = vmatprep.subr.mxu0 0.0
    %1286 = vmatpush1.msra.mxu0 %v1255
    %1287 = vmatprep.subr.mxu0 0.0
    %1288 = vmatpush1.msra.mxu0 %v1256
    %1289 = vmatprep.subr.mxu0 0.0
    %1290 = vmatpush1.msra.mxu0 %v1257
    %1291 = vmatprep.subr.mxu0 0.0
    %1292 = vmatpush1.msra.mxu0 0.0
    %1293 = vmatprep.subr.mxu0 0.0
    %1294 = vmatpush1.msra.mxu0 0.0
    %1295 = vmatprep.subr.mxu0 0.0
    %1296 = vmatpush1.msra.mxu0 0.0
    %1297 = vmatprep.subr.mxu0 0.0
    %1298 = vmatpush1.msra.mxu0 0.0
    %1299 = vmatprep.subr.mxu0 0.0
    %1300 = vmatpush1.msra.mxu0 0.0
    %1301 = vmatprep.subr.mxu0 0.0
    %1302 = vmatpush1.msra.mxu0 0.0
    %1303 = vmatprep.subr.mxu0 0.0
    %1304 = vmatpush1.msra.mxu0 0.0
    %1305 = vmatprep.subr.mxu0 0.0
    %1306 = vmatpush1.msra.mxu0 0.0
    %1307 = vmatprep.subr.mxu0 0.0
    %1308 = vmatpush1.msra.mxu0 0.0
    %1309 = vmatprep.subr.mxu0 0.0
    %1310 = vmatpush1.msra.mxu0 0.0
    %1311 = vmatprep.subr.mxu0 0.0
    %1312 = vmatpush1.msra.mxu0 0.0
    %1313 = vmatprep.subr.mxu0 0.0
    %1314 = vmatpush1.msra.mxu0 0.0
    %1315 = vmatprep.subr.mxu0 0.0
    %1316 = vmatpush1.msra.mxu0 0.0
    %1317 = vmatprep.subr.mxu0 0.0
    %1318 = vmatpush1.msra.mxu0 0.0
    %1319 = vmatprep.subr.mxu0 0.0
    %1320 = vmatpush1.msra.mxu0 0.0
    %1321 = vmatprep.subr.mxu0 0.0
    %1322 = vmatpush1.msra.mxu0 0.0
    %1323 = vmatprep.mubr.f32.mxu0 0.0
    %1324 = vmatmul.mubr.f32.gmra.mrb[0].mxu0 %v1210
    %v1325 = vpop.f32.mrb[0].mxu0
    %v1326 = vadd.f32 0.0, %v1325
    %v1327 = vpop.f32.mrb[0].mxu0
    %1328 = vmatprep.mubr.f32.mxu0 0.0
    %1329 = vmatmul.mubr.f32.gmra.mrb[0].mxu0 %v1211
    %v1330 = vpop.f32.mrb[0].mxu0
    %v1331 = vadd.f32 0.0, %v1330
    %v1332 = vpop.f32.mrb[0].mxu0
    %1333 = vmatprep.mubr.f32.mxu0 0.0
    %1334 = vmatmul.mubr.f32.gmra.mrb[0].mxu0 %v1212
    %v1335 = vpop.f32.mrb[0].mxu0
    %v1336 = vadd.f32 0.0, %v1335
    %v1337 = vpop.f32.mrb[0].mxu0
    %1338 = vmatprep.mubr.f32.mxu0 0.0
    %1339 = vmatmul.mubr.f32.gmra.mrb[0].mxu0 %v1213
    %v1340 = vpop.f32.mrb[0].mxu0
    %v1341 = vadd.f32 0.0, %v1340
    %v1342 = vpop.f32.mrb[0].mxu0
    %1343 = vmatprep.mubr.f32.mxu0 0.0
    %1344 = vmatmul.mubr.f32.gmra.mrb[0].mxu0 %v1214
    %v1345 = vpop.f32.mrb[0].mxu0
    %v1346 = vadd.f32 0.0, %v1345
    %v1347 = vpop.f32.mrb[0].mxu0
    %1348 = vmatprep.mubr.f32.mxu0 0.0
    %1349 = vmatmul.mubr.f32.gmra.mrb[0].mxu0 %v1215
    %v1350 = vpop.f32.mrb[0].mxu0
    %v1351 = vadd.f32 0.0, %v1350
    %v1352 = vpop.f32.mrb[0].mxu0
    %1353 = vmatprep.mubr.f32.mxu0 0.0
    %1354 = vmatmul.mubr.f32.gmra.mrb[0].mxu0 %v1216
    %v1355 = vpop.f32.mrb[0].mxu0
    %v1356 = vadd.f32 0.0, %v1355
    %v1357 = vpop.f32.mrb[0].mxu0
    %1358 = vmatprep.mubr.f32.mxu0 0.0
    %1359 = vmatmul.mubr.f32.gmra.mrb[0].mxu0 %v1217
    %v1360 = vpop.f32.mrb[0].mxu0
    %v1361 = vadd.f32 0.0, %v1360
    %v1362 = vpop.f32.mrb[0].mxu0
    %1363 = vmatprep.mubr.f32.mxu0 0.0
    %1364 = vmatmul.mubr.f32.gmra.mrb[0].mxu0 %v1218
    %v1365 = vpop.f32.mrb[0].mxu0
    %v1366 = vadd.f32 0.0, %v1365
    %v1367 = vpop.f32.mrb[0].mxu0
    %1368 = vmatprep.mubr.f32.mxu0 0.0
    %1369 = vmatmul.mubr.f32.gmra.mrb[0].mxu0 %v1219
    %v1370 = vpop.f32.mrb[0].mxu0
    %v1371 = vadd.f32 0.0, %v1370
    %v1372 = vpop.f32.mrb[0].mxu0
    %1373 = vmatprep.mubr.f32.mxu0 0.0
    %1374 = vmatmul.mubr.f32.gmra.mrb[0].mxu0 %v1220
    %v1375 = vpop.f32.mrb[0].mxu0
    %v1376 = vadd.f32 0.0, %v1375
    %v1377 = vpop.f32.mrb[0].mxu0
    %1378 = vmatprep.mubr.f32.mxu0 0.0
    %1379 = vmatmul.mubr.f32.gmra.mrb[0].mxu0 %v1221
    %v1380 = vpop.f32.mrb[0].mxu0
    %v1381 = vadd.f32 0.0, %v1380
    %v1382 = vpop.f32.mrb[0].mxu0
    %1383 = vmatprep.mubr.f32.mxu0 0.0
    %1384 = vmatmul.mubr.f32.gmra.mrb[0].mxu0 %v1222
    %v1385 = vpop.f32.mrb[0].mxu0
    %v1386 = vadd.f32 0.0, %v1385
    %v1387 = vpop.f32.mrb[0].mxu0
    %1388 = vmatprep.mubr.f32.mxu0 0.0
    %1389 = vmatmul.mubr.f32.gmra.mrb[0].mxu0 %v1223
    %v1390 = vpop.f32.mrb[0].mxu0
    %v1391 = vadd.f32 0.0, %v1390
    %v1392 = vpop.f32.mrb[0].mxu0
    %1393 = vmatprep.mubr.f32.mxu0 0.0
    %1394 = vmatmul.mubr.f32.gmra.mrb[0].mxu0 %v1224
    %v1395 = vpop.f32.mrb[0].mxu0
    %v1396 = vadd.f32 0.0, %v1395
    %v1397 = vpop.f32.mrb[0].mxu0
    %1398 = vmatprep.mubr.f32.mxu0 0.0
    %1399 = vmatmul.mubr.f32.gmra.mrb[0].mxu0 %v1225
    %v1400 = vpop.f32.mrb[0].mxu0
    %v1401 = vadd.f32 0.0, %v1400
    %v1402 = vpop.f32.mrb[0].mxu0
    %1403 = vdwg.mxu0
    %v1404 = vpack.c.bf16 %v1331, %v1326
    %v1405 = vpack.c.bf16 %v1341, %v1336
    %v1406 = vpack.c.bf16 %v1351, %v1346
    %v1407 = vpack.c.bf16 %v1361, %v1356
    %v1408 = vpack.c.bf16 %v1371, %v1366
    %v1409 = vpack.c.bf16 %v1381, %v1376
    %v1410 = vpack.c.bf16 %v1391, %v1386
    %v1411 = vpack.c.bf16 %v1401, %v1396
    %1412 = vmatprep.subr.bf16.mxu0 0
    %1413 = vmatpush1.bf16.msra.mxu0 %v1404
    %1414 = vmatprep.subr.bf16.mxu0 0
    %1415 = vmatpush1.bf16.msra.mxu0 %v1405
    %1416 = vmatprep.subr.bf16.mxu0 0
    %1417 = vmatpush1.bf16.msra.mxu0 %v1406
    %1418 = vmatprep.subr.bf16.mxu0 0
    %1419 = vmatpush1.bf16.msra.mxu0 %v1407
    %1420 = vmatprep.subr.bf16.mxu0 0
    %1421 = vmatpush1.bf16.msra.mxu0 %v1408
    %1422 = vmatprep.subr.bf16.mxu0 0
    %1423 = vmatpush1.bf16.msra.mxu0 %v1409
    %1424 = vmatprep.subr.bf16.mxu0 0
    %1425 = vmatpush1.bf16.msra.mxu0 %v1410
    %1426 = vmatprep.subr.bf16.mxu0 0
    %1427 = vmatpush1.bf16.msra.mxu0 %v1411
    %1428 = vmatprep.subr.bf16.mxu0 0
    %1429 = vmatpush1.bf16.msra.mxu0 0
    %1430 = vmatprep.subr.bf16.mxu0 0
    %1431 = vmatpush1.bf16.msra.mxu0 0
    %1432 = vmatprep.subr.bf16.mxu0 0
    %1433 = vmatpush1.bf16.msra.mxu0 0
    %1434 = vmatprep.subr.bf16.mxu0 0
    %1435 = vmatpush1.bf16.msra.mxu0 0
    %1436 = vmatprep.subr.bf16.mxu0 0
    %1437 = vmatpush1.bf16.msra.mxu0 0
    %1438 = vmatprep.subr.bf16.mxu0 0
    %1439 = vmatpush1.bf16.msra.mxu0 0
    %1440 = vmatprep.subr.bf16.mxu0 0
    %1441 = vmatpush1.bf16.msra.mxu0 0
    %1442 = vmatprep.subr.bf16.mxu0 0
    %1443 = vmatpush1.bf16.msra.mxu0 0
    %1444 = vmatprep.mubr.bf16.mxu0 0
    %1445 = vmatmul.mubr.bf16.gmra.mrb[0].mxu0 %v142
    %v1446 = vpop.f32.mrb[0].mxu0
    %v1447 = vadd.f32 0.0, %v1446
    %v1448 = vpop.f32.mrb[0].mxu0
    %v1449 = vpop.f32.mrb[0].mxu0
    %v1450 = vadd.f32 0.0, %v1449
    %v1451 = vpop.f32.mrb[0].mxu0
    %1452 = vmatprep.mubr.bf16.mxu0 0
    %1453 = vmatmul.mubr.bf16.gmra.mrb[0].mxu0 %v143
    %v1454 = vpop.f32.mrb[0].mxu0
    %v1455 = vadd.f32 0.0, %v1454
    %v1456 = vpop.f32.mrb[0].mxu0
    %v1457 = vpop.f32.mrb[0].mxu0
    %v1458 = vadd.f32 0.0, %v1457
    %v1459 = vpop.f32.mrb[0].mxu0
    %1460 = vmatprep.mubr.bf16.mxu0 0
    %1461 = vmatmul.mubr.bf16.gmra.mrb[0].mxu0 %v144
    %v1462 = vpop.f32.mrb[0].mxu0
    %v1463 = vadd.f32 0.0, %v1462
    %v1464 = vpop.f32.mrb[0].mxu0
    %v1465 = vpop.f32.mrb[0].mxu0
    %v1466 = vadd.f32 0.0, %v1465
    %v1467 = vpop.f32.mrb[0].mxu0
    %1468 = vmatprep.mubr.bf16.mxu0 0
    %1469 = vmatmul.mubr.bf16.gmra.mrb[0].mxu0 %v145
    %v1470 = vpop.f32.mrb[0].mxu0
    %v1471 = vadd.f32 0.0, %v1470
    %v1472 = vpop.f32.mrb[0].mxu0
    %v1473 = vpop.f32.mrb[0].mxu0
    %v1474 = vadd.f32 0.0, %v1473
    %v1475 = vpop.f32.mrb[0].mxu0
    %1476 = vmatprep.mubr.bf16.mxu0 0
    %1477 = vmatmul.mubr.bf16.gmra.mrb[0].mxu0 %v146
    %v1478 = vpop.f32.mrb[0].mxu0
    %v1479 = vadd.f32 0.0, %v1478
    %v1480 = vpop.f32.mrb[0].mxu0
    %v1481 = vpop.f32.mrb[0].mxu0
    %v1482 = vadd.f32 0.0, %v1481
    %v1483 = vpop.f32.mrb[0].mxu0
    %1484 = vmatprep.mubr.bf16.mxu0 0
    %1485 = vmatmul.mubr.bf16.gmra.mrb[0].mxu0 %v147
    %v1486 = vpop.f32.mrb[0].mxu0
    %v1487 = vadd.f32 0.0, %v1486
    %v1488 = vpop.f32.mrb[0].mxu0
    %v1489 = vpop.f32.mrb[0].mxu0
    %v1490 = vadd.f32 0.0, %v1489
    %v1491 = vpop.f32.mrb[0].mxu0
    %1492 = vmatprep.mubr.bf16.mxu0 0
    %1493 = vmatmul.mubr.bf16.gmra.mrb[0].mxu0 %v148
    %v1494 = vpop.f32.mrb[0].mxu0
    %v1495 = vadd.f32 0.0, %v1494
    %v1496 = vpop.f32.mrb[0].mxu0
    %v1497 = vpop.f32.mrb[0].mxu0
    %v1498 = vadd.f32 0.0, %v1497
    %v1499 = vpop.f32.mrb[0].mxu0
    %1500 = vmatprep.mubr.bf16.mxu0 0
    %1501 = vmatmul.mubr.bf16.gmra.mrb[0].mxu0 %v149
    %v1502 = vpop.f32.mrb[0].mxu0
    %v1503 = vadd.f32 0.0, %v1502
    %v1504 = vpop.f32.mrb[0].mxu0
    %v1505 = vpop.f32.mrb[0].mxu0
    %v1506 = vadd.f32 0.0, %v1505
    %v1507 = vpop.f32.mrb[0].mxu0
    %1508 = vdwg.mxu0
    %v1509 = vmul.f32 %v1447, %v468
    %v1510 = vmul.f32 %v1450, %v473
    %v1511 = vmul.f32 %v1455, %v478
    %v1512 = vmul.f32 %v1458, %v483
    %v1513 = vmul.f32 %v1463, %v488
    %v1514 = vmul.f32 %v1466, %v493
    %v1515 = vmul.f32 %v1471, %v498
    %v1516 = vmul.f32 %v1474, %v503
    %v1517 = vmul.f32 %v1479, %v508
    %v1518 = vmul.f32 %v1482, %v513
    %v1519 = vmul.f32 %v1487, %v518
    %v1520 = vmul.f32 %v1490, %v523
    %v1521 = vmul.f32 %v1495, %v528
    %v1522 = vmul.f32 %v1498, %v533
    %v1523 = vmul.f32 %v1503, %v538
    %v1524 = vmul.f32 %v1506, %v543
    %1525 = vmatprep.subr.mxu0 0.0
    %1526 = vmatpush1.msra.mxu0 %v1226
    %1527 = vmatprep.subr.mxu0 0.0
    %1528 = vmatpush1.msra.mxu0 %v1227
    %1529 = vmatprep.subr.mxu0 0.0
    %1530 = vmatpush1.msra.mxu0 %v1228
    %1531 = vmatprep.subr.mxu0 0.0
    %1532 = vmatpush1.msra.mxu0 %v1229
    %1533 = vmatprep.subr.mxu0 0.0
    %1534 = vmatpush1.msra.mxu0 %v1230
    %1535 = vmatprep.subr.mxu0 0.0
    %1536 = vmatpush1.msra.mxu0 %v1231
    %1537 = vmatprep.subr.mxu0 0.0
    %1538 = vmatpush1.msra.mxu0 %v1232
    %1539 = vmatprep.subr.mxu0 0.0
    %1540 = vmatpush1.msra.mxu0 %v1233
    %1541 = vmatprep.subr.mxu0 0.0
    %1542 = vmatpush1.msra.mxu0 %v1234
    %1543 = vmatprep.subr.mxu0 0.0
    %1544 = vmatpush1.msra.mxu0 %v1235
    %1545 = vmatprep.subr.mxu0 0.0
    %1546 = vmatpush1.msra.mxu0 %v1236
    %1547 = vmatprep.subr.mxu0 0.0
    %1548 = vmatpush1.msra.mxu0 %v1237
    %1549 = vmatprep.subr.mxu0 0.0
    %1550 = vmatpush1.msra.mxu0 %v1238
    %1551 = vmatprep.subr.mxu0 0.0
    %1552 = vmatpush1.msra.mxu0 %v1239
    %1553 = vmatprep.subr.mxu0 0.0
    %1554 = vmatpush1.msra.mxu0 %v1240
    %1555 = vmatprep.subr.mxu0 0.0
    %1556 = vmatpush1.msra.mxu0 %v1241
    %1557 = vmatprep.subr.mxu0 0.0
    %1558 = vmatpush1.msra.mxu0 0.0
    %1559 = vmatprep.subr.mxu0 0.0
    %1560 = vmatpush1.msra.mxu0 0.0
    %1561 = vmatprep.subr.mxu0 0.0
    %1562 = vmatpush1.msra.mxu0 0.0
    %1563 = vmatprep.subr.mxu0 0.0
    %1564 = vmatpush1.msra.mxu0 0.0
    %1565 = vmatprep.subr.mxu0 0.0
    %1566 = vmatpush1.msra.mxu0 0.0
    %1567 = vmatprep.subr.mxu0 0.0
    %1568 = vmatpush1.msra.mxu0 0.0
    %1569 = vmatprep.subr.mxu0 0.0
    %1570 = vmatpush1.msra.mxu0 0.0
    %1571 = vmatprep.subr.mxu0 0.0
    %1572 = vmatpush1.msra.mxu0 0.0
    %1573 = vmatprep.subr.mxu0 0.0
    %1574 = vmatpush1.msra.mxu0 0.0
    %1575 = vmatprep.subr.mxu0 0.0
    %1576 = vmatpush1.msra.mxu0 0.0
    %1577 = vmatprep.subr.mxu0 0.0
    %1578 = vmatpush1.msra.mxu0 0.0
    %1579 = vmatprep.subr.mxu0 0.0
    %1580 = vmatpush1.msra.mxu0 0.0
    %1581 = vmatprep.subr.mxu0 0.0
    %1582 = vmatpush1.msra.mxu0 0.0
    %1583 = vmatprep.subr.mxu0 0.0
    %1584 = vmatpush1.msra.mxu0 0.0
    %1585 = vmatprep.subr.mxu0 0.0
    %1586 = vmatpush1.msra.mxu0 0.0
    %1587 = vmatprep.subr.mxu0 0.0
    %1588 = vmatpush1.msra.mxu0 0.0
    %1589 = vmatprep.mubr.f32.mxu0 0.0
    %1590 = vmatmul.mubr.f32.gmra.mrb[0].mxu0 %v1210
    %v1591 = vpop.f32.mrb[0].mxu0
    %v1592 = vadd.f32 %v1509, %v1591
    %v1593 = vpop.f32.mrb[0].mxu0
    %1594 = vmatprep.mubr.f32.mxu0 0.0
    %1595 = vmatmul.mubr.f32.gmra.mrb[0].mxu0 %v1211
    %v1596 = vpop.f32.mrb[0].mxu0
    %v1597 = vadd.f32 %v1510, %v1596
    %v1598 = vpop.f32.mrb[0].mxu0
    %1599 = vmatprep.mubr.f32.mxu0 0.0
    %1600 = vmatmul.mubr.f32.gmra.mrb[0].mxu0 %v1212
    %v1601 = vpop.f32.mrb[0].mxu0
    %v1602 = vadd.f32 %v1511, %v1601
    %v1603 = vpop.f32.mrb[0].mxu0
    %1604 = vmatprep.mubr.f32.mxu0 0.0
    %1605 = vmatmul.mubr.f32.gmra.mrb[0].mxu0 %v1213
    %v1606 = vpop.f32.mrb[0].mxu0
    %v1607 = vadd.f32 %v1512, %v1606
    %v1608 = vpop.f32.mrb[0].mxu0
    %1609 = vmatprep.mubr.f32.mxu0 0.0
    %1610 = vmatmul.mubr.f32.gmra.mrb[0].mxu0 %v1214
    %v1611 = vpop.f32.mrb[0].mxu0
    %v1612 = vadd.f32 %v1513, %v1611
    %v1613 = vpop.f32.mrb[0].mxu0
    %1614 = vmatprep.mubr.f32.mxu0 0.0
    %1615 = vmatmul.mubr.f32.gmra.mrb[0].mxu0 %v1215
    %v1616 = vpop.f32.mrb[0].mxu0
    %v1617 = vadd.f32 %v1514, %v1616
    %v1618 = vpop.f32.mrb[0].mxu0
    %1619 = vmatprep.mubr.f32.mxu0 0.0
    %1620 = vmatmul.mubr.f32.gmra.mrb[0].mxu0 %v1216
    %v1621 = vpop.f32.mrb[0].mxu0
    %v1622 = vadd.f32 %v1515, %v1621
    %v1623 = vpop.f32.mrb[0].mxu0
    %1624 = vmatprep.mubr.f32.mxu0 0.0
    %1625 = vmatmul.mubr.f32.gmra.mrb[0].mxu0 %v1217
    %v1626 = vpop.f32.mrb[0].mxu0
    %v1627 = vadd.f32 %v1516, %v1626
    %v1628 = vpop.f32.mrb[0].mxu0
    %1629 = vmatprep.mubr.f32.mxu0 0.0
    %1630 = vmatmul.mubr.f32.gmra.mrb[0].mxu0 %v1218
    %v1631 = vpop.f32.mrb[0].mxu0
    %v1632 = vadd.f32 %v1517, %v1631
    %v1633 = vpop.f32.mrb[0].mxu0
    %1634 = vmatprep.mubr.f32.mxu0 0.0
    %1635 = vmatmul.mubr.f32.gmra.mrb[0].mxu0 %v1219
    %v1636 = vpop.f32.mrb[0].mxu0
    %v1637 = vadd.f32 %v1518, %v1636
    %v1638 = vpop.f32.mrb[0].mxu0
    %1639 = vmatprep.mubr.f32.mxu0 0.0
    %1640 = vmatmul.mubr.f32.gmra.mrb[0].mxu0 %v1220
    %v1641 = vpop.f32.mrb[0].mxu0
    %v1642 = vadd.f32 %v1519, %v1641
    %v1643 = vpop.f32.mrb[0].mxu0
    %1644 = vmatprep.mubr.f32.mxu0 0.0
    %1645 = vmatmul.mubr.f32.gmra.mrb[0].mxu0 %v1221
    %v1646 = vpop.f32.mrb[0].mxu0
    %v1647 = vadd.f32 %v1520, %v1646
    %v1648 = vpop.f32.mrb[0].mxu0
    %1649 = vmatprep.mubr.f32.mxu0 0.0
    %1650 = vmatmul.mubr.f32.gmra.mrb[0].mxu0 %v1222
    %v1651 = vpop.f32.mrb[0].mxu0
    %v1652 = vadd.f32 %v1521, %v1651
    %v1653 = vpop.f32.mrb[0].mxu0
    %1654 = vmatprep.mubr.f32.mxu0 0.0
    %1655 = vmatmul.mubr.f32.gmra.mrb[0].mxu0 %v1223
    %v1656 = vpop.f32.mrb[0].mxu0
    %v1657 = vadd.f32 %v1522, %v1656
    %v1658 = vpop.f32.mrb[0].mxu0
    %1659 = vmatprep.mubr.f32.mxu0 0.0
    %1660 = vmatmul.mubr.f32.gmra.mrb[0].mxu0 %v1224
    %v1661 = vpop.f32.mrb[0].mxu0
    %v1662 = vadd.f32 %v1523, %v1661
    %v1663 = vpop.f32.mrb[0].mxu0
    %1664 = vmatprep.mubr.f32.mxu0 0.0
    %1665 = vmatmul.mubr.f32.gmra.mrb[0].mxu0 %v1225
    %v1666 = vpop.f32.mrb[0].mxu0
    %v1667 = vadd.f32 %v1524, %v1666
    %v1668 = vpop.f32.mrb[0].mxu0
    %1669 = vdwg.mxu0
    %v1671 = vlaneseq
    %v1672 = vshrl.u32 %v1671, 7
    %v1673 = vsub.s32 0, %v1672
    %v1674 = vrot.slane %v1258, %v1673
    %v1676 = vadd.f32 %v1592, %v1674
    %v1677 = vadd.f32 %v1597, %v1674
    %v1678 = vadd.f32 %v1602, %v1674
    %v1679 = vadd.f32 %v1607, %v1674
    %v1680 = vadd.f32 %v1612, %v1674
    %v1681 = vadd.f32 %v1617, %v1674
    %v1682 = vadd.f32 %v1622, %v1674
    %v1683 = vadd.f32 %v1627, %v1674
    %v1684 = vadd.f32 %v1632, %v1674
    %v1685 = vadd.f32 %v1637, %v1674
    %v1686 = vadd.f32 %v1642, %v1674
    %v1687 = vadd.f32 %v1647, %v1674
    %v1688 = vadd.f32 %v1652, %v1674
    %v1689 = vadd.f32 %v1657, %v1674
    %v1690 = vadd.f32 %v1662, %v1674
    %v1691 = vadd.f32 %v1667, %v1674
    %1692 = vst [vmem:[#allocation14] sm:$0xff] %v1676
    %1693 = vst [vmem:[#allocation14 + $0x8] sm:$0xff] %v1677
    %1694 = vst [vmem:[#allocation14 + $0x10] sm:$0xff] %v1678
    %1695 = vst [vmem:[#allocation14 + $0x18] sm:$0xff] %v1679
    %1696 = vst [vmem:[#allocation14 + $0x20] sm:$0xff] %v1680
    %1697 = vst [vmem:[#allocation14 + $0x28] sm:$0xff] %v1681
    %1698 = vst [vmem:[#allocation14 + $0x30] sm:$0xff] %v1682
    %1699 = vst [vmem:[#allocation14 + $0x38] sm:$0xff] %v1683
    %1700 = vst [vmem:[#allocation14 + $0x40] sm:$0xff] %v1684
    %1701 = vst [vmem:[#allocation14 + $0x48] sm:$0xff] %v1685
    %1702 = vst [vmem:[#allocation14 + $0x50] sm:$0xff] %v1686
    %1703 = vst [vmem:[#allocation14 + $0x58] sm:$0xff] %v1687
    %1704 = vst [vmem:[#allocation14 + $0x60] sm:$0xff] %v1688
    %1705 = vst [vmem:[#allocation14 + $0x68] sm:$0xff] %v1689
    %1706 = vst [vmem:[#allocation14 + $0x70] sm:$0xff] %v1690
    %1707 = vst [vmem:[#allocation14 + $0x78] sm:$0xff] %v1691
    // Predicated region
    $region78: #{tpu_custom_call.1} parent=1 // pred_check
      _
    $region79: #{tpu_custom_call.1} parent=1 // pred_check_branch
      %1709 = sbr.rel (0) target = $region81
    $region80: #{tpu_custom_call.1} parent=1 // pred_region
      %s1711 = ssub.s32 2048, 2048
      %1712 = vsyncadd [#allocation4], %s1711
      %s1713 = sshll.u32 [#allocation14], 4
      %s1714 = int_to_ptr.vmem [resolvable:$true] %s1713
      %1719 = dma.vmem_to_hbm [thread:$0]  %s1714, 2048, %s12, [#allocation4], 128, 128, 8
    $region81: #{tpu_custom_call.1} parent=1 // pred_fallthru
      _
    // Predicated region
    $region82: #{tpu_custom_call.1} parent=1 // pred_check
      _
    $region83: #{tpu_custom_call.1} parent=1 // pred_check_branch
      %1721 = sbr.rel (0) target = $region85
    $region84: #{tpu_custom_call.1} parent=1 // pred_region
      %1722 = dma.done [#allocation4], 2048
    $region85: #{tpu_custom_call.1} parent=1 // pred_fallthru
      _
    %1723 = vsyncpa [#allocation3], 1
    %1724 = vsyncpa [#allocation6], 1
    %1725 = vsyncpa [#allocation9], 1
    %1726 = vsyncpa [#allocation12], 1
    %1727 = vsyncpa [#allocation4], 1

</llo_original>
